<compile_context>
chip_gen: v6e
topology: v6e:2x2x1
jax: 0.10.0
libtpu: 0.0.40
codegen_flags: <defaults>
</compile_context>

<pallas_src>
import functools

import jax
import jax.numpy as jnp
from jax import lax
from jax.experimental import pallas as pl
from jax.experimental.pallas import tpu as pltpu

PAD_ID = 0
NEG_INF = -1e30


def _pick_tile(dim, target):
    """Largest tile <= target that evenly divides dim (falls back to full dim)."""
    if dim <= target:
        return dim
    for t in range(target, 0, -1):
        if dim % t == 0:
            return t
    return dim


# ------------------- fused RMSNorm + matmul (QKV proj, lm head) -------------------


def _norm_matmul_kernel(x_ref, g_ref, w_ref, o_ref, *, eps):
    x = x_ref[...].astype(jnp.float32)                        # (tm, D)
    ms = jnp.mean(x * x, axis=-1, keepdims=True)
    xn = (x * lax.rsqrt(ms + eps) * g_ref[...].astype(jnp.float32)).astype(jnp.bfloat16)
    o_ref[...] = jnp.dot(xn, w_ref[...],
                         preferred_element_type=jnp.float32).astype(o_ref.dtype)


def pallas_norm_matmul(x, gamma, w, out_dtype=jnp.bfloat16, eps=1e-6, tm=256, tn=256):
    """out = rmsnorm(x) * gamma @ w.  x:(M,D) bf16, w:(D,N) bf16."""
    M, D = x.shape
    D2, N = w.shape
    assert D == D2
    tm = _pick_tile(M, tm)
    tn = _pick_tile(N, tn)
    return pl.pallas_call(
        functools.partial(_norm_matmul_kernel, eps=eps),
        out_shape=jax.ShapeDtypeStruct((M, N), out_dtype),
        grid=(M // tm, N // tn),
        in_specs=[
            pl.BlockSpec((tm, D), lambda i, j: (i, 0)),
            pl.BlockSpec((1, D), lambda i, j: (0, 0)),
            pl.BlockSpec((D, tn), lambda i, j: (0, j)),
        ],
        out_specs=pl.BlockSpec((tm, tn), lambda i, j: (i, j)),
        compiler_params=pltpu.CompilerParams(
            dimension_semantics=("parallel", "parallel")),
    )(x, gamma.reshape(1, D), w)


# ------------------- tiled matmul + residual add (attention out proj) -------------------


def _matmul_res_kernel(x_ref, w_ref, r_ref, o_ref, acc_ref):
    @pl.when(pl.program_id(2) == 0)
    def _():
        acc_ref[...] = jnp.zeros_like(acc_ref)

    acc_ref[...] += jnp.dot(x_ref[...], w_ref[...], preferred_element_type=jnp.float32)

    @pl.when(pl.program_id(2) == pl.num_programs(2) - 1)
    def _():
        o_ref[...] = (acc_ref[...] + r_ref[...].astype(jnp.float32)).astype(o_ref.dtype)


def pallas_matmul_residual(x, w, res, out_dtype=jnp.bfloat16, tm=256, tn=256, tk=512):
    """out = res + x @ w.  K axis tiled + accumulated in f32 VMEM scratch."""
    M, K = x.shape
    K2, N = w.shape
    assert K == K2 and res.shape == (M, N)
    tm = _pick_tile(M, tm)
    tn = _pick_tile(N, tn)
    tk = _pick_tile(K, tk)
    return pl.pallas_call(
        _matmul_res_kernel,
        out_shape=jax.ShapeDtypeStruct((M, N), out_dtype),
        grid=(M // tm, N // tn, K // tk),
        in_specs=[
            pl.BlockSpec((tm, tk), lambda i, j, k: (i, k)),
            pl.BlockSpec((tk, tn), lambda i, j, k: (k, j)),
            pl.BlockSpec((tm, tn), lambda i, j, k: (i, j)),
        ],
        out_specs=pl.BlockSpec((tm, tn), lambda i, j, k: (i, j)),
        scratch_shapes=[pltpu.VMEM((tm, tn), jnp.float32)],
        compiler_params=pltpu.CompilerParams(
            dimension_semantics=("parallel", "parallel", "arbitrary")),
    )(x, w, res)


# ------------------- fused RMSNorm + SwiGLU FFN + residual -------------------


def _ffn_kernel(x_ref, g_ref, w1_ref, w3_ref, w2_ref, o_ref, acc_ref, *, eps):
    @pl.when(pl.program_id(1) == 0)
    def _():
        acc_ref[...] = jnp.zeros_like(acc_ref)

    x = x_ref[...].astype(jnp.float32)                        # (tm, D)
    ms = jnp.mean(x * x, axis=-1, keepdims=True)
    xn = (x * lax.rsqrt(ms + eps) * g_ref[...].astype(jnp.float32)).astype(jnp.bfloat16)

    a = jnp.dot(xn, w1_ref[...], preferred_element_type=jnp.float32)   # (tm, ti)
    b = jnp.dot(xn, w3_ref[...], preferred_element_type=jnp.float32)
    hmid = (a * jax.nn.sigmoid(a) * b).astype(jnp.bfloat16)            # SwiGLU
    acc_ref[...] += jnp.dot(hmid, w2_ref[...], preferred_element_type=jnp.float32)

    @pl.when(pl.program_id(1) == pl.num_programs(1) - 1)
    def _():
        o_ref[...] = (acc_ref[...] + x).astype(o_ref.dtype)   # fused residual add


def pallas_ffn(x, gamma, w1, w3, w2, out_dtype=jnp.bfloat16, eps=1e-6, tm=256, ti=512):
    """out = x + w2( silu(rmsnorm(x)@w1) * (rmsnorm(x)@w3) ); I axis streamed."""
    M, D = x.shape
    D2, I = w1.shape
    assert D2 == D and w3.shape == (D, I) and w2.shape == (I, D)
    tm = _pick_tile(M, tm)
    ti = _pick_tile(I, ti)
    return pl.pallas_call(
        functools.partial(_ffn_kernel, eps=eps),
        out_shape=jax.ShapeDtypeStruct((M, D), out_dtype),
        grid=(M // tm, I // ti),
        in_specs=[
            pl.BlockSpec((tm, D), lambda i, l: (i, 0)),
            pl.BlockSpec((1, D), lambda i, l: (0, 0)),
            pl.BlockSpec((D, ti), lambda i, l: (0, l)),
            pl.BlockSpec((D, ti), lambda i, l: (0, l)),
            pl.BlockSpec((ti, D), lambda i, l: (l, 0)),
        ],
        out_specs=pl.BlockSpec((tm, D), lambda i, l: (i, 0)),
        scratch_shapes=[pltpu.VMEM((tm, D), jnp.float32)],
        compiler_params=pltpu.CompilerParams(
            dimension_semantics=("parallel", "arbitrary")),
    )(x, gamma.reshape(1, D), w1, w3, w2)


# ------------------- flash attention (online softmax, causal, pad-key bias) -------------------


def _flash_attn_kernel(q_ref, k_ref, v_ref, bias_ref, o_ref,
                       m_sc, l_sc, acc_sc, *, n_heads, head_dim, tq, tkv):
    ki = pl.program_id(2)
    q_start = pl.program_id(1) * tq
    kv_start = ki * tkv

    @pl.when(ki == 0)
    def _():
        m_sc[...] = jnp.full_like(m_sc, NEG_INF)
        l_sc[...] = jnp.zeros_like(l_sc)
        acc_sc[...] = jnp.zeros_like(acc_sc)

    # Skip KV tiles that are fully above the causal diagonal.
    @pl.when(kv_start <= q_start + (tq - 1))
    def _():
        bias = bias_ref[0]                                            # (1, tkv) f32
        row = q_start + lax.broadcasted_iota(jnp.int32, (tq, tkv), 0)
        col = kv_start + lax.broadcasted_iota(jnp.int32, (tq, tkv), 1)
        causal = col <= row
        for h in range(n_heads):
            lo, hi = h * head_dim, (h + 1) * head_dim
            qh = q_ref[0, :, lo:hi]                                   # (tq, Dh) bf16
            kh = k_ref[0, :, lo:hi]                                   # (tkv, Dh) bf16
            vh = v_ref[0, :, lo:hi]                                   # (tkv, Dh) bf16
            # scores = q @ k^T (1/sqrt(Dh) already folded into wq)
            s = lax.dot_general(qh, kh, (((1,), (1,)), ((), ())),
                                preferred_element_type=jnp.float32)   # (tq, tkv)
            s = jnp.where(causal, s + bias, NEG_INF)

            m_prev = m_sc[:, h:h + 1]
            l_prev = l_sc[:, h:h + 1]
            m_new = jnp.maximum(m_prev, jnp.max(s, axis=-1, keepdims=True))
            alpha = jnp.exp(m_prev - m_new)
            p = jnp.exp(s - m_new)
            l_sc[:, h:h + 1] = alpha * l_prev + jnp.sum(p, axis=-1, keepdims=True)
            acc_sc[:, lo:hi] = alpha * acc_sc[:, lo:hi] + jnp.dot(
                p.astype(vh.dtype), vh, preferred_element_type=jnp.float32)
            m_sc[:, h:h + 1] = m_new

    @pl.when(ki == pl.num_programs(2) - 1)
    def _():
        outs = []
        for h in range(n_heads):
            lo, hi = h * head_dim, (h + 1) * head_dim
            inv = pl.reciprocal(jnp.maximum(l_sc[:, h:h + 1], 1e-30), approx=True)
            outs.append(acc_sc[:, lo:hi] * inv)
        o_ref[0] = jnp.concatenate(outs, axis=-1).astype(o_ref.dtype)


def pallas_flash_attention(q, k, v, bias, n_heads, head_dim, tq=256, tkv=256):
    """Causal softmax attention on (B, S, H*Dh) slabs; pad keys masked via `bias`."""
    B, S, HD = q.shape
    assert HD == n_heads * head_dim
    tq = _pick_tile(S, tq)
    tkv = _pick_tile(S, tkv)
    kernel = functools.partial(_flash_attn_kernel, n_heads=n_heads,
                               head_dim=head_dim, tq=tq, tkv=tkv)
    return pl.pallas_call(
        kernel,
        out_shape=jax.ShapeDtypeStruct((B, S, HD), q.dtype),
        grid=(B, S // tq, S // tkv),
        in_specs=[
            pl.BlockSpec((1, tq, HD), lambda b, qi, ki: (b, qi, 0)),
            pl.BlockSpec((1, tkv, HD), lambda b, qi, ki: (b, ki, 0)),
            pl.BlockSpec((1, tkv, HD), lambda b, qi, ki: (b, ki, 0)),
            pl.BlockSpec((1, 1, tkv), lambda b, qi, ki: (b, 0, ki)),
        ],
        out_specs=pl.BlockSpec((1, tq, HD), lambda b, qi, ki: (b, qi, 0)),
        scratch_shapes=[
            pltpu.VMEM((tq, n_heads), jnp.float32),   # running max per head
            pltpu.VMEM((tq, n_heads), jnp.float32),   # running sum per head
            pltpu.VMEM((tq, HD), jnp.float32),        # output accumulator
        ],
        compiler_params=pltpu.CompilerParams(
            dimension_semantics=("parallel", "parallel", "arbitrary")),
    )(q, k, v, bias)


# ------------------------------ model (glue) -------------------------------


def precompute_freqs(max_seq_len, head_dim, theta=10000.0):
    freqs = 1.0 / (theta ** (jnp.arange(0, head_dim, 2, dtype=jnp.float32) / head_dim))
    t = jnp.arange(max_seq_len, dtype=jnp.float32)
    ang = jnp.outer(t, freqs)                       # (max_seq_len, head_dim // 2)
    return jnp.cos(ang), jnp.sin(ang)


def apply_rope(x, cos, sin):
    """x: (B, S, H, Dh) bf16; cos/sin: (B, S, Dh//2).  Adjacent-pair convention."""
    B, S, H, Dh = x.shape
    xf = x.astype(jnp.float32).reshape(B, S, H, Dh // 2, 2)
    x0, x1 = xf[..., 0], xf[..., 1]
    c = cos[:, :, None, :]
    s = sin[:, :, None, :]
    o0 = x0 * c - x1 * s
    o1 = x0 * s + x1 * c
    return jnp.stack([o0, o1], axis=-1).reshape(B, S, H, Dh).astype(jnp.bfloat16)


def init_params(key, cfg):
    vocab, dim = cfg["vocab_size"], cfg["dim"]
    H, Dh, inter = cfg["n_heads"], cfg["head_dim"], cfg["inter_dim"]
    scale = 1.0 / float(Dh) ** 0.5

    def nrm(k, shape, std=0.02):
        return jax.random.normal(k, shape, jnp.float32) * std

    keys = jax.random.split(key, 2 + cfg["n_layers"])
    params = {
        "embed": nrm(keys[0], (vocab, dim)).astype(jnp.bfloat16),
        "norm": jnp.ones((dim,), jnp.float32),
        "head": nrm(keys[1], (dim, vocab)).astype(jnp.bfloat16),
        "layers": [],
    }
    for i in range(cfg["n_layers"]):
        lk = jax.random.split(keys[2 + i], 7)
        wq = nrm(lk[0], (dim, H * Dh)) * scale     # fold 1/sqrt(Dh) into wq
        wk = nrm(lk[1], (dim, H * Dh))
        wv = nrm(lk[2], (dim, H * Dh))
        params["layers"].append({
            "attn_norm": jnp.ones((dim,), jnp.float32),
            "wqkv": jnp.concatenate([wq, wk, wv], axis=1).astype(jnp.bfloat16),
            "wo": nrm(lk[3], (H * Dh, dim)).astype(jnp.bfloat16),
            "ffn_norm": jnp.ones((dim,), jnp.float32),
            "w1": nrm(lk[4], (dim, inter)).astype(jnp.bfloat16),
            "w3": nrm(lk[5], (dim, inter)).astype(jnp.bfloat16),
            "w2": nrm(lk[6], (inter, dim)).astype(jnp.bfloat16),
        })
    cos, sin = precompute_freqs(cfg["max_seq_len"], Dh)
    params["freqs_cos"], params["freqs_sin"] = cos, sin
    return params


def block_forward(lp, h2, cos, sin, bias, B, S, cfg):
    H, Dh = cfg["n_heads"], cfg["head_dim"]
    HD = H * Dh

    # --- attention (fused rmsnorm + QKV projection, flash attention, fused out-proj+res) ---
    qkv = pallas_norm_matmul(h2, lp["attn_norm"], lp["wqkv"])       # (B*S, 3*H*Dh) bf16
    q, k, v = qkv[:, :HD], qkv[:, HD:2 * HD], qkv[:, 2 * HD:]
    q = apply_rope(q.reshape(B, S, H, Dh), cos, sin).reshape(B, S, HD)
    k = apply_rope(k.reshape(B, S, H, Dh), cos, sin).reshape(B, S, HD)
    v = v.reshape(B, S, HD)
    attn = pallas_flash_attention(q, k, v, bias, H, Dh).reshape(B * S, HD)
    h2 = pallas_matmul_residual(attn, lp["wo"], h2)                 # h2 + attn @ wo

    # --- feed-forward (fused rmsnorm + SwiGLU + down-proj + residual) ---
    h2 = pallas_ffn(h2, lp["ffn_norm"], lp["w1"], lp["w3"], lp["w2"])
    return h2


def transformer_forward(params, tokens, dummy, cfg, attn_mask=None, start_pos=0,
                        use_lora=True):
    assert dummy is not None
    B, S = tokens.shape
    D = cfg["dim"]

    # embedding lookup (glue)
    h2 = params["embed"][tokens].astype(jnp.bfloat16).reshape(B * S, D)

    # positions of non-pad tokens; pad positions get zeroed rotary freqs (matches
    # the reference's masked_fill(..., 0) on freqs_cis)
    pos = jnp.cumsum((tokens != PAD_ID).astype(jnp.int32), axis=1) - 1
    pos = jnp.clip(pos, 0, None)
    cos = params["freqs_cos"][start_pos + pos]                      # (B, S, Dh//2)
    sin = params["freqs_sin"][start_pos + pos]
    padmask = (tokens == PAD_ID)[..., None]
    cos = jnp.where(padmask, 0.0, cos)
    sin = jnp.where(padmask, 0.0, sin)

    # additive key bias: pad keys never receive attention weight
    bias = jnp.where(tokens == PAD_ID, NEG_INF, 0.0).astype(jnp.float32).reshape(B, 1, S)
    # TODO(synk): attn_mask (Block internals unspecified) would be folded into `bias` here.

    for lp in params["layers"]:
        h2 = block_forward(lp, h2, cos, sin, bias, B, S, cfg)

    # fused final RMSNorm + lm head
    logits = pallas_norm_matmul(h2, params["norm"], params["head"],
                                out_dtype=jnp.float32)
    # distnn.all_gather + cat(dim=-1): identity for world size 1
    return logits.reshape(B, S, cfg["vocab_size"])


# --------------------------------- main ------------------------------------

if __name__ == "__main__":
    cfg = dict(
        vocab_size=64,
        dim=32,
        n_layers=2,
        n_heads=4,
        head_dim=8,
        inter_dim=64,
        max_seq_len=16,
    )
    B, S = 2, 8

    key = jax.random.PRNGKey(0)
    kp, kt = jax.random.split(key)
    params = init_params(kp, cfg)

    tokens = jax.random.randint(kt, (B, S), 1, cfg["vocab_size"], dtype=jnp.int32)
    tokens = tokens.at[:, -2:].set(PAD_ID)  # trailing padding to exercise masking
    dummy = jnp.zeros((1,), jnp.float32)

    fwd = jax.jit(functools.partial(transformer_forward, cfg=cfg))
    logits = fwd(params, tokens, dummy)
    jax.block_until_ready(logits)

    assert logits.shape == (B, S, cfg["vocab_size"])
    assert bool(jnp.all(jnp.isfinite(logits)))
    print("KERNEL_OK")
</pallas_src>

<mosaic_0001>
module attributes {stable_mosaic.version = 11 : i64} {
  func.func @_norm_matmul_kernel(%arg0: i32, %arg1: i32, %arg2: memref<16x32xbf16, #tpu.memory_space<vmem>>, %arg3: memref<1x32xf32, #tpu.memory_space<vmem>>, %arg4: memref<32x96xbf16, #tpu.memory_space<vmem>>, %arg5: memref<16x96xbf16, #tpu.memory_space<vmem>>) attributes {dimension_semantics = [#tpu.dimension_semantics<parallel>, #tpu.dimension_semantics<parallel>], iteration_bounds = array<i64: 1, 1>, scalar_prefetch = 0 : i64, scratch_operands = 0 : i64, tpu.core_type = #tpu.core_type<tc>, window_params = [{transform_indices = @transform_0, window_bounds = array<i64: 16, 32>}, {pipeline_mode = #tpu.pipeline_mode<synchronous>, transform_indices = @transform_1, window_bounds = array<i64: 1, 32>}, {transform_indices = @transform_2, window_bounds = array<i64: 32, 96>}, {transform_indices = @transform_3, window_bounds = array<i64: 16, 96>}]} {
    %c0 = arith.constant 0 : index
    %c0_0 = arith.constant 0 : index
    %0 = vector.load %arg2[%c0, %c0_0] : memref<16x32xbf16, #tpu.memory_space<vmem>>, vector<16x32xbf16>
    %1 = arith.extf %0 : vector<16x32xbf16> to vector<16x32xf32>
    %2 = arith.mulf %1, %1 : vector<16x32xf32>
    %cst = arith.constant dense<0.000000e+00> : vector<16xf32>
    %3 = vector.multi_reduction <add>, %2, %cst [1] : vector<16x32xf32> to vector<16xf32>
    %4 = vector.shape_cast %3 : vector<16xf32> to vector<16x1xf32>
    %cst_1 = arith.constant 3.200000e+01 : f32
    %5 = vector.broadcast %cst_1 : f32 to vector<16x1xf32>
    %6 = arith.divf %4, %5 : vector<16x1xf32>
    %cst_2 = arith.constant 9.99999997E-7 : f32
    %7 = vector.broadcast %cst_2 : f32 to vector<16x1xf32>
    %8 = arith.addf %6, %7 : vector<16x1xf32>
    %9 = math.rsqrt %8 : vector<16x1xf32>
    %10 = vector.broadcast %9 : vector<16x1xf32> to vector<16x32xf32>
    %11 = arith.mulf %1, %10 : vector<16x32xf32>
    %c0_3 = arith.constant 0 : index
    %c0_4 = arith.constant 0 : index
    %12 = vector.load %arg3[%c0_3, %c0_4] : memref<1x32xf32, #tpu.memory_space<vmem>>, vector<1x32xf32>
    %13 = vector.broadcast %12 : vector<1x32xf32> to vector<16x32xf32>
    %14 = arith.mulf %11, %13 : vector<16x32xf32>
    %15 = arith.truncf %14 : vector<16x32xf32> to vector<16x32xbf16>
    %c0_5 = arith.constant 0 : index
    %c0_6 = arith.constant 0 : index
    %16 = vector.load %arg4[%c0_5, %c0_6] : memref<32x96xbf16, #tpu.memory_space<vmem>>, vector<32x96xbf16>
    %cst_7 = arith.constant dense<0.000000e+00> : vector<16x96xf32>
    %17 = tpu.matmul %15, %16, %cst_7 {dimension_numbers = #tpu.dot_dimension_numbers<[1], [0], [0], [1], [0, 0, 1, 1], [], []>} : vector<16x32xbf16>, vector<32x96xbf16>, vector<16x96xf32> -> vector<16x96xf32>
    %18 = arith.truncf %17 : vector<16x96xf32> to vector<16x96xbf16>
    %c0_8 = arith.constant 0 : index
    %c0_9 = arith.constant 0 : index
    %19 = vector.load %arg5[%c0_8, %c0_9] : memref<16x96xbf16, #tpu.memory_space<vmem>>, vector<16x96xbf16>
    tpu.vector_store %arg5[%c0_8, %c0_9], %18 {strides = array<i32>} : memref<16x96xbf16, #tpu.memory_space<vmem>>, vector<16x96xbf16>,
    return
  }
  func.func @transform_0(%arg0: i32, %arg1: i32) -> (i32, i32) {
    %c0_i32 = arith.constant 0 : i32
    %c0_i32_0 = arith.constant 0 : i32
    return %arg0, %c0_i32 : i32, i32
  }
  func.func @transform_1(%arg0: i32, %arg1: i32) -> (i32, i32) {
    %c0_i32 = arith.constant 0 : i32
    %c0_i32_0 = arith.constant 0 : i32
    %c0_i32_1 = arith.constant 0 : i32
    return %c0_i32, %c0_i32_0 : i32, i32
  }
  func.func @transform_2(%arg0: i32, %arg1: i32) -> (i32, i32) {
    %c0_i32 = arith.constant 0 : i32
    %c0_i32_0 = arith.constant 0 : i32
    return %c0_i32, %arg1 : i32, i32
  }
  func.func @transform_3(%arg0: i32, %arg1: i32) -> (i32, i32) {
    %c0_i32 = arith.constant 0 : i32
    return %arg0, %arg1 : i32, i32
  }
}

module attributes {stable_mosaic.version = 11 : i64} {
  func.func @_flash_attn_kernel(%arg0: i32, %arg1: i32, %arg2: i32, %arg3: memref<1x8x32xbf16, #tpu.memory_space<vmem>>, %arg4: memref<1x8x32xbf16, #tpu.memory_space<vmem>>, %arg5: memref<1x8x32xbf16, #tpu.memory_space<vmem>>, %arg6: memref<1x1x8xf32, #tpu.memory_space<vmem>>, %arg7: memref<1x8x32xbf16, #tpu.memory_space<vmem>>, %arg8: memref<8x4xf32, #tpu.memory_space<vmem>>, %arg9: memref<8x4xf32, #tpu.memory_space<vmem>>, %arg10: memref<8x32xf32, #tpu.memory_space<vmem>>) attributes {dimension_semantics = [#tpu.dimension_semantics<parallel>, #tpu.dimension_semantics<parallel>, #tpu.dimension_semantics<arbitrary>], iteration_bounds = array<i64: 2, 1, 1>, scalar_prefetch = 0 : i64, scratch_operands = 3 : i64, tpu.core_type = #tpu.core_type<tc>, window_params = [{transform_indices = @transform_0, window_bounds = array<i64: 1, 8, 32>}, {transform_indices = @transform_1, window_bounds = array<i64: 1, 8, 32>}, {transform_indices = @transform_2, window_bounds = array<i64: 1, 8, 32>}, {transform_indices = @transform_3, window_bounds = array<i64: 1, 1, 8>}, {transform_indices = @transform_4, window_bounds = array<i64: 1, 8, 32>}]} {
    %c8_i32 = arith.constant 8 : i32
    %0 = arith.muli %arg1, %c8_i32 : i32
    %c8_i32_0 = arith.constant 8 : i32
    %1 = arith.muli %arg2, %c8_i32_0 : i32
    %c0_i32 = arith.constant 0 : i32
    %2 = arith.cmpi eq, %arg2, %c0_i32 : i32
    %3 = arith.extui %2 : i1 to i32
    %c0_i32_1 = arith.constant 0 : i32
    %4 = arith.cmpi ne, %3, %c0_i32_1 : i32
    scf.if %4 {
      %cst = arith.constant -1.000000e+30 : f32
      %12 = vector.broadcast %cst : f32 to vector<8x4xf32>
      %c0 = arith.constant 0 : index
      %c0_5 = arith.constant 0 : index
      %13 = vector.load %arg8[%c0, %c0_5] : memref<8x4xf32, #tpu.memory_space<vmem>>, vector<8x4xf32>
      tpu.vector_store %arg8[%c0, %c0_5], %12 {strides = array<i32>} : memref<8x4xf32, #tpu.memory_space<vmem>>, vector<8x4xf32>,
      %cst_6 = arith.constant 0.000000e+00 : f32
      %14 = vector.broadcast %cst_6 : f32 to vector<8x4xf32>
      %c0_7 = arith.constant 0 : index
      %c0_8 = arith.constant 0 : index
      %15 = vector.load %arg9[%c0_7, %c0_8] : memref<8x4xf32, #tpu.memory_space<vmem>>, vector<8x4xf32>
      tpu.vector_store %arg9[%c0_7, %c0_8], %14 {strides = array<i32>} : memref<8x4xf32, #tpu.memory_space<vmem>>, vector<8x4xf32>,
      %cst_9 = arith.constant 0.000000e+00 : f32
      %16 = vector.broadcast %cst_9 : f32 to vector<8x32xf32>
      %c0_10 = arith.constant 0 : index
      %c0_11 = arith.constant 0 : index
      %17 = vector.load %arg10[%c0_10, %c0_11] : memref<8x32xf32, #tpu.memory_space<vmem>>, vector<8x32xf32>
      tpu.vector_store %arg10[%c0_10, %c0_11], %16 {strides = array<i32>} : memref<8x32xf32, #tpu.memory_space<vmem>>, vector<8x32xf32>,
    } else {
    }
    %c7_i32 = arith.constant 7 : i32
    %5 = arith.addi %0, %c7_i32 : i32
    %6 = arith.cmpi sle, %1, %5 : i32
    %7 = arith.extui %6 : i1 to i32
    %c0_i32_2 = arith.constant 0 : i32
    %8 = arith.cmpi ne, %7, %c0_i32_2 : i32
    scf.if %8 {
      %c0 = arith.constant 0 : index
      %c0_5 = arith.constant 0 : index
      %c0_6 = arith.constant 0 : index
      %12 = vector.load %arg6[%c0, %c0_5, %c0_6] : memref<1x1x8xf32, #tpu.memory_space<vmem>>, vector<1x1x8xf32>
      %13 = vector.shape_cast %12 : vector<1x1x8xf32> to vector<1x8xf32>
      %14 = tpu.iota {dimensions = array<i32: 0>} : vector<8x8xi32>
      %15 = vector.broadcast %0 : i32 to vector<8x8xi32>
      %16 = arith.addi %15, %14 : vector<8x8xi32>
      %17 = tpu.iota {dimensions = array<i32: 1>} : vector<8x8xi32>
      %18 = vector.broadcast %1 : i32 to vector<8x8xi32>
      %19 = arith.addi %18, %17 : vector<8x8xi32>
      %20 = arith.cmpi sle, %19, %16 : vector<8x8xi32>
      %c0_7 = arith.constant 0 : index
      %c0_8 = arith.constant 0 : index
      %c0_9 = arith.constant 0 : index
      %21 = vector.load %arg3[%c0_7, %c0_8, %c0_9] : memref<1x8x32xbf16, #tpu.memory_space<vmem>>, vector<1x8x8xbf16>
      %22 = vector.shape_cast %21 : vector<1x8x8xbf16> to vector<8x8xbf16>
      %c0_10 = arith.constant 0 : index
      %c0_11 = arith.constant 0 : index
      %c0_12 = arith.constant 0 : index
      %23 = vector.load %arg4[%c0_10, %c0_11, %c0_12] : memref<1x8x32xbf16, #tpu.memory_space<vmem>>, vector<1x8x8xbf16>
      %24 = vector.shape_cast %23 : vector<1x8x8xbf16> to vector<8x8xbf16>
      %c0_13 = arith.constant 0 : index
      %c0_14 = arith.constant 0 : index
      %c0_15 = arith.constant 0 : index
      %25 = vector.load %arg5[%c0_13, %c0_14, %c0_15] : memref<1x8x32xbf16, #tpu.memory_space<vmem>>, vector<1x8x8xbf16>
      %26 = vector.shape_cast %25 : vector<1x8x8xbf16> to vector<8x8xbf16>
      %cst = arith.constant dense<0.000000e+00> : vector<8x8xf32>
      %27 = tpu.matmul %22, %24, %cst {dimension_numbers = #tpu.dot_dimension_numbers<[1], [1], [0], [0], [0, 0, 1, 0], [], []>} : vector<8x8xbf16>, vector<8x8xbf16>, vector<8x8xf32> -> vector<8x8xf32>
      %28 = vector.broadcast %13 : vector<1x8xf32> to vector<8x8xf32>
      %29 = arith.addf %27, %28 : vector<8x8xf32>
      %cst_16 = arith.constant -1.000000e+30 : f32
      %30 = vector.broadcast %cst_16 : f32 to vector<8x8xf32>
      %31 = arith.select %20, %29, %30 : vector<8x8xi1>, vector<8x8xf32>
      %c0_17 = arith.constant 0 : index
      %c0_18 = arith.constant 0 : index
      %32 = vector.load %arg8[%c0_17, %c0_18] : memref<8x4xf32, #tpu.memory_space<vmem>>, vector<8x1xf32>
      %c0_19 = arith.constant 0 : index
      %c0_20 = arith.constant 0 : index
      %33 = vector.load %arg9[%c0_19, %c0_20] : memref<8x4xf32, #tpu.memory_space<vmem>>, vector<8x1xf32>
      %cst_21 = arith.constant dense<0xFF800000> : vector<8xf32>
      %34 = vector.multi_reduction <maximumf>, %31, %cst_21 [1] : vector<8x8xf32> to vector<8xf32>
      %35 = vector.shape_cast %34 : vector<8xf32> to vector<8x1xf32>
      %36 = arith.maximumf %32, %35 : vector<8x1xf32>
      %37 = arith.subf %32, %36 : vector<8x1xf32>
      %38 = math.exp %37 : vector<8x1xf32>
      %39 = vector.broadcast %36 : vector<8x1xf32> to vector<8x8xf32>
      %40 = arith.subf %31, %39 : vector<8x8xf32>
      %41 = math.exp %40 : vector<8x8xf32>
      %42 = arith.mulf %38, %33 : vector<8x1xf32>
      %cst_22 = arith.constant dense<0.000000e+00> : vector<8xf32>
      %43 = vector.multi_reduction <add>, %41, %cst_22 [1] : vector<8x8xf32> to vector<8xf32>
      %44 = vector.shape_cast %43 : vector<8xf32> to vector<8x1xf32>
      %45 = arith.addf %42, %44 : vector<8x1xf32>
      %c0_23 = arith.constant 0 : index
      %c0_24 = arith.constant 0 : index
      %46 = vector.load %arg9[%c0_23, %c0_24] : memref<8x4xf32, #tpu.memory_space<vmem>>, vector<8x1xf32>
      tpu.vector_store %arg9[%c0_23, %c0_24], %45 {strides = array<i32>} : memref<8x4xf32, #tpu.memory_space<vmem>>, vector<8x1xf32>,
      %c0_25 = arith.constant 0 : index
      %c0_26 = arith.constant 0 : index
      %47 = vector.load %arg10[%c0_25, %c0_26] : memref<8x32xf32, #tpu.memory_space<vmem>>, vector<8x8xf32>
      %48 = vector.broadcast %38 : vector<8x1xf32> to vector<8x8xf32>
      %49 = arith.mulf %48, %47 : vector<8x8xf32>
      %50 = arith.truncf %41 : vector<8x8xf32> to vector<8x8xbf16>
      %cst_27 = arith.constant dense<0.000000e+00> : vector<8x8xf32>
      %51 = tpu.matmul %50, %26, %cst_27 {dimension_numbers = #tpu.dot_dimension_numbers<[1], [0], [0], [1], [0, 0, 1, 1], [], []>} : vector<8x8xbf16>, vector<8x8xbf16>, vector<8x8xf32> -> vector<8x8xf32>
      %52 = arith.addf %49, %51 : vector<8x8xf32>
      %c0_28 = arith.constant 0 : index
      %c0_29 = arith.constant 0 : index
      %53 = vector.load %arg10[%c0_28, %c0_29] : memref<8x32xf32, #tpu.memory_space<vmem>>, vector<8x8xf32>
      tpu.vector_store %arg10[%c0_28, %c0_29], %52 {strides = array<i32>} : memref<8x32xf32, #tpu.memory_space<vmem>>, vector<8x8xf32>,
      %c0_30 = arith.constant 0 : index
      %c0_31 = arith.constant 0 : index
      %54 = vector.load %arg8[%c0_30, %c0_31] : memref<8x4xf32, #tpu.memory_space<vmem>>, vector<8x1xf32>
      tpu.vector_store %arg8[%c0_30, %c0_31], %36 {strides = array<i32>} : memref<8x4xf32, #tpu.memory_space<vmem>>, vector<8x1xf32>,
      %c0_32 = arith.constant 0 : index
      %c0_33 = arith.constant 0 : index
      %c8 = arith.constant 8 : index
      %55 = vector.load %arg3[%c0_32, %c0_33, %c8] : memref<1x8x32xbf16, #tpu.memory_space<vmem>>, vector<1x8x8xbf16>
      %56 = vector.shape_cast %55 : vector<1x8x8xbf16> to vector<8x8xbf16>
      %c0_34 = arith.constant 0 : index
      %c0_35 = arith.constant 0 : index
      %c8_36 = arith.constant 8 : index
      %57 = vector.load %arg4[%c0_34, %c0_35, %c8_36] : memref<1x8x32xbf16, #tpu.memory_space<vmem>>, vector<1x8x8xbf16>
      %58 = vector.shape_cast %57 : vector<1x8x8xbf16> to vector<8x8xbf16>
      %c0_37 = arith.constant 0 : index
      %c0_38 = arith.constant 0 : index
      %c8_39 = arith.constant 8 : index
      %59 = vector.load %arg5[%c0_37, %c0_38, %c8_39] : memref<1x8x32xbf16, #tpu.memory_space<vmem>>, vector<1x8x8xbf16>
      %60 = vector.shape_cast %59 : vector<1x8x8xbf16> to vector<8x8xbf16>
      %cst_40 = arith.constant dense<0.000000e+00> : vector<8x8xf32>
      %61 = tpu.matmul %56, %58, %cst_40 {dimension_numbers = #tpu.dot_dimension_numbers<[1], [1], [0], [0], [0, 0, 1, 0], [], []>} : vector<8x8xbf16>, vector<8x8xbf16>, vector<8x8xf32> -> vector<8x8xf32>
      %62 = vector.broadcast %13 : vector<1x8xf32> to vector<8x8xf32>
      %63 = arith.addf %61, %62 : vector<8x8xf32>
      %cst_41 = arith.constant -1.000000e+30 : f32
      %64 = vector.broadcast %cst_41 : f32 to vector<8x8xf32>
      %65 = arith.select %20, %63, %64 : vector<8x8xi1>, vector<8x8xf32>
      %c0_42 = arith.constant 0 : index
      %c1 = arith.constant 1 : index
      %66 = vector.load %arg8[%c0_42, %c1] : memref<8x4xf32, #tpu.memory_space<vmem>>, vector<8x1xf32>
      %c0_43 = arith.constant 0 : index
      %c1_44 = arith.constant 1 : index
      %67 = vector.load %arg9[%c0_43, %c1_44] : memref<8x4xf32, #tpu.memory_space<vmem>>, vector<8x1xf32>
      %cst_45 = arith.constant dense<0xFF800000> : vector<8xf32>
      %68 = vector.multi_reduction <maximumf>, %65, %cst_45 [1] : vector<8x8xf32> to vector<8xf32>
      %69 = vector.shape_cast %68 : vector<8xf32> to vector<8x1xf32>
      %70 = arith.maximumf %66, %69 : vector<8x1xf32>
      %71 = arith.subf %66, %70 : vector<8x1xf32>
      %72 = math.exp %71 : vector<8x1xf32>
      %73 = vector.broadcast %70 : vector<8x1xf32> to vector<8x8xf32>
      %74 = arith.subf %65, %73 : vector<8x8xf32>
      %75 = math.exp %74 : vector<8x8xf32>
      %76 = arith.mulf %72, %67 : vector<8x1xf32>
      %cst_46 = arith.constant dense<0.000000e+00> : vector<8xf32>
      %77 = vector.multi_reduction <add>, %75, %cst_46 [1] : vector<8x8xf32> to vector<8xf32>
      %78 = vector.shape_cast %77 : vector<8xf32> to vector<8x1xf32>
      %79 = arith.addf %76, %78 : vector<8x1xf32>
      %c0_47 = arith.constant 0 : index
      %c1_48 = arith.constant 1 : index
      %80 = vector.load %arg9[%c0_47, %c1_48] : memref<8x4xf32, #tpu.memory_space<vmem>>, vector<8x1xf32>
      tpu.vector_store %arg9[%c0_47, %c1_48], %79 {strides = array<i32>} : memref<8x4xf32, #tpu.memory_space<vmem>>, vector<8x1xf32>,
      %c0_49 = arith.constant 0 : index
      %c8_50 = arith.constant 8 : index
      %81 = vector.load %arg10[%c0_49, %c8_50] : memref<8x32xf32, #tpu.memory_space<vmem>>, vector<8x8xf32>
      %82 = vector.broadcast %72 : vector<8x1xf32> to vector<8x8xf32>
      %83 = arith.mulf %82, %81 : vector<8x8xf32>
      %84 = arith.truncf %75 : vector<8x8xf32> to vector<8x8xbf16>
      %cst_51 = arith.constant dense<0.000000e+00> : vector<8x8xf32>
      %85 = tpu.matmul %84, %60, %cst_51 {dimension_numbers = #tpu.dot_dimension_numbers<[1], [0], [0], [1], [0, 0, 1, 1], [], []>} : vector<8x8xbf16>, vector<8x8xbf16>, vector<8x8xf32> -> vector<8x8xf32>
      %86 = arith.addf %83, %85 : vector<8x8xf32>
      %c0_52 = arith.constant 0 : index
      %c8_53 = arith.constant 8 : index
      %87 = vector.load %arg10[%c0_52, %c8_53] : memref<8x32xf32, #tpu.memory_space<vmem>>, vector<8x8xf32>
      tpu.vector_store %arg10[%c0_52, %c8_53], %86 {strides = array<i32>} : memref<8x32xf32, #tpu.memory_space<vmem>>, vector<8x8xf32>,
      %c0_54 = arith.constant 0 : index
      %c1_55 = arith.constant 1 : index
      %88 = vector.load %arg8[%c0_54, %c1_55] : memref<8x4xf32, #tpu.memory_space<vmem>>, vector<8x1xf32>
      tpu.vector_store %arg8[%c0_54, %c1_55], %70 {strides = array<i32>} : memref<8x4xf32, #tpu.memory_space<vmem>>, vector<8x1xf32>,
      %c0_56 = arith.constant 0 : index
      %c0_57 = arith.constant 0 : index
      %c16 = arith.constant 16 : index
      %89 = vector.load %arg3[%c0_56, %c0_57, %c16] : memref<1x8x32xbf16, #tpu.memory_space<vmem>>, vector<1x8x8xbf16>
      %90 = vector.shape_cast %89 : vector<1x8x8xbf16> to vector<8x8xbf16>
      %c0_58 = arith.constant 0 : index
      %c0_59 = arith.constant 0 : index
      %c16_60 = arith.constant 16 : index
      %91 = vector.load %arg4[%c0_58, %c0_59, %c16_60] : memref<1x8x32xbf16, #tpu.memory_space<vmem>>, vector<1x8x8xbf16>
      %92 = vector.shape_cast %91 : vector<1x8x8xbf16> to vector<8x8xbf16>
      %c0_61 = arith.constant 0 : index
      %c0_62 = arith.constant 0 : index
      %c16_63 = arith.constant 16 : index
      %93 = vector.load %arg5[%c0_61, %c0_62, %c16_63] : memref<1x8x32xbf16, #tpu.memory_space<vmem>>, vector<1x8x8xbf16>
      %94 = vector.shape_cast %93 : vector<1x8x8xbf16> to vector<8x8xbf16>
      %cst_64 = arith.constant dense<0.000000e+00> : vector<8x8xf32>
      %95 = tpu.matmul %90, %92, %cst_64 {dimension_numbers = #tpu.dot_dimension_numbers<[1], [1], [0], [0], [0, 0, 1, 0], [], []>} : vector<8x8xbf16>, vector<8x8xbf16>, vector<8x8xf32> -> vector<8x8xf32>
      %96 = vector.broadcast %13 : vector<1x8xf32> to vector<8x8xf32>
      %97 = arith.addf %95, %96 : vector<8x8xf32>
      %cst_65 = arith.constant -1.000000e+30 : f32
      %98 = vector.broadcast %cst_65 : f32 to vector<8x8xf32>
      %99 = arith.select %20, %97, %98 : vector<8x8xi1>, vector<8x8xf32>
      %c0_66 = arith.constant 0 : index
      %c2 = arith.constant 2 : index
      %100 = vector.load %arg8[%c0_66, %c2] : memref<8x4xf32, #tpu.memory_space<vmem>>, vector<8x1xf32>
      %c0_67 = arith.constant 0 : index
      %c2_68 = arith.constant 2 : index
      %101 = vector.load %arg9[%c0_67, %c2_68] : memref<8x4xf32, #tpu.memory_space<vmem>>, vector<8x1xf32>
      %cst_69 = arith.constant dense<0xFF800000> : vector<8xf32>
      %102 = vector.multi_reduction <maximumf>, %99, %cst_69 [1] : vector<8x8xf32> to vector<8xf32>
      %103 = vector.shape_cast %102 : vector<8xf32> to vector<8x1xf32>
      %104 = arith.maximumf %100, %103 : vector<8x1xf32>
      %105 = arith.subf %100, %104 : vector<8x1xf32>
      %106 = math.exp %105 : vector<8x1xf32>
      %107 = vector.broadcast %104 : vector<8x1xf32> to vector<8x8xf32>
      %108 = arith.subf %99, %107 : vector<8x8xf32>
      %109 = math.exp %108 : vector<8x8xf32>
      %110 = arith.mulf %106, %101 : vector<8x1xf32>
      %cst_70 = arith.constant dense<0.000000e+00> : vector<8xf32>
      %111 = vector.multi_reduction <add>, %109, %cst_70 [1] : vector<8x8xf32> to vector<8xf32>
      %112 = vector.shape_cast %111 : vector<8xf32> to vector<8x1xf32>
      %113 = arith.addf %110, %112 : vector<8x1xf32>
      %c0_71 = arith.constant 0 : index
      %c2_72 = arith.constant 2 : index
      %114 = vector.load %arg9[%c0_71, %c2_72] : memref<8x4xf32, #tpu.memory_space<vmem>>, vector<8x1xf32>
      tpu.vector_store %arg9[%c0_71, %c2_72], %113 {strides = array<i32>} : memref<8x4xf32, #tpu.memory_space<vmem>>, vector<8x1xf32>,
      %c0_73 = arith.constant 0 : index
      %c16_74 = arith.constant 16 : index
      %115 = vector.load %arg10[%c0_73, %c16_74] : memref<8x32xf32, #tpu.memory_space<vmem>>, vector<8x8xf32>
      %116 = vector.broadcast %106 : vector<8x1xf32> to vector<8x8xf32>
      %117 = arith.mulf %116, %115 : vector<8x8xf32>
      %118 = arith.truncf %109 : vector<8x8xf32> to vector<8x8xbf16>
      %cst_75 = arith.constant dense<0.000000e+00> : vector<8x8xf32>
      %119 = tpu.matmul %118, %94, %cst_75 {dimension_numbers = #tpu.dot_dimension_numbers<[1], [0], [0], [1], [0, 0, 1, 1], [], []>} : vector<8x8xbf16>, vector<8x8xbf16>, vector<8x8xf32> -> vector<8x8xf32>
      %120 = arith.addf %117, %119 : vector<8x8xf32>
      %c0_76 = arith.constant 0 : index
      %c16_77 = arith.constant 16 : index
      %121 = vector.load %arg10[%c0_76, %c16_77] : memref<8x32xf32, #tpu.memory_space<vmem>>, vector<8x8xf32>
      tpu.vector_store %arg10[%c0_76, %c16_77], %120 {strides = array<i32>} : memref<8x32xf32, #tpu.memory_space<vmem>>, vector<8x8xf32>,
      %c0_78 = arith.constant 0 : index
      %c2_79 = arith.constant 2 : index
      %122 = vector.load %arg8[%c0_78, %c2_79] : memref<8x4xf32, #tpu.memory_space<vmem>>, vector<8x1xf32>
      tpu.vector_store %arg8[%c0_78, %c2_79], %104 {strides = array<i32>} : memref<8x4xf32, #tpu.memory_space<vmem>>, vector<8x1xf32>,
      %c0_80 = arith.constant 0 : index
      %c0_81 = arith.constant 0 : index
      %c24 = arith.constant 24 : index
      %123 = vector.load %arg3[%c0_80, %c0_81, %c24] : memref<1x8x32xbf16, #tpu.memory_space<vmem>>, vector<1x8x8xbf16>
      %124 = vector.shape_cast %123 : vector<1x8x8xbf16> to vector<8x8xbf16>
      %c0_82 = arith.constant 0 : index
      %c0_83 = arith.constant 0 : index
      %c24_84 = arith.constant 24 : index
      %125 = vector.load %arg4[%c0_82, %c0_83, %c24_84] : memref<1x8x32xbf16, #tpu.memory_space<vmem>>, vector<1x8x8xbf16>
      %126 = vector.shape_cast %125 : vector<1x8x8xbf16> to vector<8x8xbf16>
      %c0_85 = arith.constant 0 : index
      %c0_86 = arith.constant 0 : index
      %c24_87 = arith.constant 24 : index
      %127 = vector.load %arg5[%c0_85, %c0_86, %c24_87] : memref<1x8x32xbf16, #tpu.memory_space<vmem>>, vector<1x8x8xbf16>
      %128 = vector.shape_cast %127 : vector<1x8x8xbf16> to vector<8x8xbf16>
      %cst_88 = arith.constant dense<0.000000e+00> : vector<8x8xf32>
      %129 = tpu.matmul %124, %126, %cst_88 {dimension_numbers = #tpu.dot_dimension_numbers<[1], [1], [0], [0], [0, 0, 1, 0], [], []>} : vector<8x8xbf16>, vector<8x8xbf16>, vector<8x8xf32> -> vector<8x8xf32>
      %130 = vector.broadcast %13 : vector<1x8xf32> to vector<8x8xf32>
      %131 = arith.addf %129, %130 : vector<8x8xf32>
      %cst_89 = arith.constant -1.000000e+30 : f32
      %132 = vector.broadcast %cst_89 : f32 to vector<8x8xf32>
      %133 = arith.select %20, %131, %132 : vector<8x8xi1>, vector<8x8xf32>
      %c0_90 = arith.constant 0 : index
      %c3 = arith.constant 3 : index
      %134 = vector.load %arg8[%c0_90, %c3] : memref<8x4xf32, #tpu.memory_space<vmem>>, vector<8x1xf32>
      %c0_91 = arith.constant 0 : index
      %c3_92 = arith.constant 3 : index
      %135 = vector.load %arg9[%c0_91, %c3_92] : memref<8x4xf32, #tpu.memory_space<vmem>>, vector<8x1xf32>
      %cst_93 = arith.constant dense<0xFF800000> : vector<8xf32>
      %136 = vector.multi_reduction <maximumf>, %133, %cst_93 [1] : vector<8x8xf32> to vector<8xf32>
      %137 = vector.shape_cast %136 : vector<8xf32> to vector<8x1xf32>
      %138 = arith.maximumf %134, %137 : vector<8x1xf32>
      %139 = arith.subf %134, %138 : vector<8x1xf32>
      %140 = math.exp %139 : vector<8x1xf32>
      %141 = vector.broadcast %138 : vector<8x1xf32> to vector<8x8xf32>
      %142 = arith.subf %133, %141 : vector<8x8xf32>
      %143 = math.exp %142 : vector<8x8xf32>
      %144 = arith.mulf %140, %135 : vector<8x1xf32>
      %cst_94 = arith.constant dense<0.000000e+00> : vector<8xf32>
      %145 = vector.multi_reduction <add>, %143, %cst_94 [1] : vector<8x8xf32> to vector<8xf32>
      %146 = vector.shape_cast %145 : vector<8xf32> to vector<8x1xf32>
      %147 = arith.addf %144, %146 : vector<8x1xf32>
      %c0_95 = arith.constant 0 : index
      %c3_96 = arith.constant 3 : index
      %148 = vector.load %arg9[%c0_95, %c3_96] : memref<8x4xf32, #tpu.memory_space<vmem>>, vector<8x1xf32>
      tpu.vector_store %arg9[%c0_95, %c3_96], %147 {strides = array<i32>} : memref<8x4xf32, #tpu.memory_space<vmem>>, vector<8x1xf32>,
      %c0_97 = arith.constant 0 : index
      %c24_98 = arith.constant 24 : index
      %149 = vector.load %arg10[%c0_97, %c24_98] : memref<8x32xf32, #tpu.memory_space<vmem>>, vector<8x8xf32>
      %150 = vector.broadcast %140 : vector<8x1xf32> to vector<8x8xf32>
      %151 = arith.mulf %150, %149 : vector<8x8xf32>
      %152 = arith.truncf %143 : vector<8x8xf32> to vector<8x8xbf16>
      %cst_99 = arith.constant dense<0.000000e+00> : vector<8x8xf32>
      %153 = tpu.matmul %152, %128, %cst_99 {dimension_numbers = #tpu.dot_dimension_numbers<[1], [0], [0], [1], [0, 0, 1, 1], [], []>} : vector<8x8xbf16>, vector<8x8xbf16>, vector<8x8xf32> -> vector<8x8xf32>
      %154 = arith.addf %151, %153 : vector<8x8xf32>
      %c0_100 = arith.constant 0 : index
      %c24_101 = arith.constant 24 : index
      %155 = vector.load %arg10[%c0_100, %c24_101] : memref<8x32xf32, #tpu.memory_space<vmem>>, vector<8x8xf32>
      tpu.vector_store %arg10[%c0_100, %c24_101], %154 {strides = array<i32>} : memref<8x32xf32, #tpu.memory_space<vmem>>, vector<8x8xf32>,
      %c0_102 = arith.constant 0 : index
      %c3_103 = arith.constant 3 : index
      %156 = vector.load %arg8[%c0_102, %c3_103] : memref<8x4xf32, #tpu.memory_space<vmem>>, vector<8x1xf32>
      tpu.vector_store %arg8[%c0_102, %c3_103], %138 {strides = array<i32>} : memref<8x4xf32, #tpu.memory_space<vmem>>, vector<8x1xf32>,
    } else {
    }
    %c0_i32_3 = arith.constant 0 : i32
    %9 = arith.cmpi eq, %arg2, %c0_i32_3 : i32
    %10 = arith.extui %9 : i1 to i32
    %c0_i32_4 = arith.constant 0 : i32
    %11 = arith.cmpi ne, %10, %c0_i32_4 : i32
    scf.if %11 {
      %c0 = arith.constant 0 : index
      %c0_5 = arith.constant 0 : index
      %12 = vector.load %arg9[%c0, %c0_5] : memref<8x4xf32, #tpu.memory_space<vmem>>, vector<8x1xf32>
      %cst = arith.constant 1.000000e-30 : f32
      %13 = vector.broadcast %cst : f32 to vector<8x1xf32>
      %14 = arith.maximumf %12, %13 : vector<8x1xf32>
      %15 = tpu.reciprocal %14 {approx = true} : vector<8x1xf32> -> vector<8x1xf32>
      %c0_6 = arith.constant 0 : index
      %c0_7 = arith.constant 0 : index
      %16 = vector.load %arg10[%c0_6, %c0_7] : memref<8x32xf32, #tpu.memory_space<vmem>>, vector<8x8xf32>
      %17 = vector.broadcast %15 : vector<8x1xf32> to vector<8x8xf32>
      %18 = arith.mulf %16, %17 : vector<8x8xf32>
      %c0_8 = arith.constant 0 : index
      %c1 = arith.constant 1 : index
      %19 = vector.load %arg9[%c0_8, %c1] : memref<8x4xf32, #tpu.memory_space<vmem>>, vector<8x1xf32>
      %cst_9 = arith.constant 1.000000e-30 : f32
      %20 = vector.broadcast %cst_9 : f32 to vector<8x1xf32>
      %21 = arith.maximumf %19, %20 : vector<8x1xf32>
      %22 = tpu.reciprocal %21 {approx = true} : vector<8x1xf32> -> vector<8x1xf32>
      %c0_10 = arith.constant 0 : index
      %c8 = arith.constant 8 : index
      %23 = vector.load %arg10[%c0_10, %c8] : memref<8x32xf32, #tpu.memory_space<vmem>>, vector<8x8xf32>
      %24 = vector.broadcast %22 : vector<8x1xf32> to vector<8x8xf32>
      %25 = arith.mulf %23, %24 : vector<8x8xf32>
      %c0_11 = arith.constant 0 : index
      %c2 = arith.constant 2 : index
      %26 = vector.load %arg9[%c0_11, %c2] : memref<8x4xf32, #tpu.memory_space<vmem>>, vector<8x1xf32>
      %cst_12 = arith.constant 1.000000e-30 : f32
      %27 = vector.broadcast %cst_12 : f32 to vector<8x1xf32>
      %28 = arith.maximumf %26, %27 : vector<8x1xf32>
      %29 = tpu.reciprocal %28 {approx = true} : vector<8x1xf32> -> vector<8x1xf32>
      %c0_13 = arith.constant 0 : index
      %c16 = arith.constant 16 : index
      %30 = vector.load %arg10[%c0_13, %c16] : memref<8x32xf32, #tpu.memory_space<vmem>>, vector<8x8xf32>
      %31 = vector.broadcast %29 : vector<8x1xf32> to vector<8x8xf32>
      %32 = arith.mulf %30, %31 : vector<8x8xf32>
      %c0_14 = arith.constant 0 : index
      %c3 = arith.constant 3 : index
      %33 = vector.load %arg9[%c0_14, %c3] : memref<8x4xf32, #tpu.memory_space<vmem>>, vector<8x1xf32>
      %cst_15 = arith.constant 1.000000e-30 : f32
      %34 = vector.broadcast %cst_15 : f32 to vector<8x1xf32>
      %35 = arith.maximumf %33, %34 : vector<8x1xf32>
      %36 = tpu.reciprocal %35 {approx = true} : vector<8x1xf32> -> vector<8x1xf32>
      %c0_16 = arith.constant 0 : index
      %c24 = arith.constant 24 : index
      %37 = vector.load %arg10[%c0_16, %c24] : memref<8x32xf32, #tpu.memory_space<vmem>>, vector<8x8xf32>
      %38 = vector.broadcast %36 : vector<8x1xf32> to vector<8x8xf32>
      %39 = arith.mulf %37, %38 : vector<8x8xf32>
      %40 = tpu.concatenate %18, %25, %32, %39 in 1 : vector<8x8xf32>, vector<8x8xf32>, vector<8x8xf32>, vector<8x8xf32> -> vector<8x32xf32>
      %41 = arith.truncf %40 : vector<8x32xf32> to vector<8x32xbf16>
      %c0_17 = arith.constant 0 : index
      %c0_18 = arith.constant 0 : index
      %c0_19 = arith.constant 0 : index
      %42 = vector.load %arg7[%c0_17, %c0_18, %c0_19] : memref<1x8x32xbf16, #tpu.memory_space<vmem>>, vector<1x8x32xbf16>
      %43 = vector.shape_cast %42 : vector<1x8x32xbf16> to vector<8x32xbf16>
      %44 = vector.shape_cast %41 : vector<8x32xbf16> to vector<1x8x32xbf16>
      tpu.vector_store %arg7[%c0_17, %c0_18, %c0_19], %44 {strides = array<i32>} : memref<1x8x32xbf16, #tpu.memory_space<vmem>>, vector<1x8x32xbf16>,
    } else {
    }
    return
  }
  func.func @transform_0(%arg0: i32, %arg1: i32, %arg2: i32) -> (i32, i32, i32) {
    %c0_i32 = arith.constant 0 : i32
    %c0_i32_0 = arith.constant 0 : i32
    return %arg0, %arg1, %c0_i32 : i32, i32, i32
  }
  func.func @transform_1(%arg0: i32, %arg1: i32, %arg2: i32) -> (i32, i32, i32) {
    %c0_i32 = arith.constant 0 : i32
    %c0_i32_0 = arith.constant 0 : i32
    return %arg0, %arg2, %c0_i32 : i32, i32, i32
  }
  func.func @transform_2(%arg0: i32, %arg1: i32, %arg2: i32) -> (i32, i32, i32) {
    %c0_i32 = arith.constant 0 : i32
    %c0_i32_0 = arith.constant 0 : i32
    return %arg0, %arg2, %c0_i32 : i32, i32, i32
  }
  func.func @transform_3(%arg0: i32, %arg1: i32, %arg2: i32) -> (i32, i32, i32) {
    %c0_i32 = arith.constant 0 : i32
    %c0_i32_0 = arith.constant 0 : i32
    return %arg0, %c0_i32, %arg2 : i32, i32, i32
  }
  func.func @transform_4(%arg0: i32, %arg1: i32, %arg2: i32) -> (i32, i32, i32) {
    %c0_i32 = arith.constant 0 : i32
    %c0_i32_0 = arith.constant 0 : i32
    return %arg0, %arg1, %c0_i32 : i32, i32, i32
  }
}

module attributes {stable_mosaic.version = 11 : i64} {
  func.func @_matmul_res_kernel(%arg0: i32, %arg1: i32, %arg2: i32, %arg3: memref<16x32xbf16, #tpu.memory_space<vmem>>, %arg4: memref<32x32xbf16, #tpu.memory_space<vmem>>, %arg5: memref<16x32xbf16, #tpu.memory_space<vmem>>, %arg6: memref<16x32xbf16, #tpu.memory_space<vmem>>, %arg7: memref<16x32xf32, #tpu.memory_space<vmem>>) attributes {dimension_semantics = [#tpu.dimension_semantics<parallel>, #tpu.dimension_semantics<parallel>, #tpu.dimension_semantics<arbitrary>], iteration_bounds = array<i64: 1, 1, 1>, scalar_prefetch = 0 : i64, scratch_operands = 1 : i64, tpu.core_type = #tpu.core_type<tc>, window_params = [{transform_indices = @transform_0, window_bounds = array<i64: 16, 32>}, {transform_indices = @transform_1, window_bounds = array<i64: 32, 32>}, {transform_indices = @transform_2, window_bounds = array<i64: 16, 32>}, {transform_indices = @transform_3, window_bounds = array<i64: 16, 32>}]} {
    %c0_i32 = arith.constant 0 : i32
    %0 = arith.cmpi eq, %arg2, %c0_i32 : i32
    %1 = arith.extui %0 : i1 to i32
    %c0_i32_0 = arith.constant 0 : i32
    %2 = arith.cmpi ne, %1, %c0_i32_0 : i32
    scf.if %2 {
      %cst_10 = arith.constant 0.000000e+00 : f32
      %12 = vector.broadcast %cst_10 : f32 to vector<16x32xf32>
      %c0_11 = arith.constant 0 : index
      %c0_12 = arith.constant 0 : index
      %13 = vector.load %arg7[%c0_11, %c0_12] : memref<16x32xf32, #tpu.memory_space<vmem>>, vector<16x32xf32>
      tpu.vector_store %arg7[%c0_11, %c0_12], %12 {strides = array<i32>} : memref<16x32xf32, #tpu.memory_space<vmem>>, vector<16x32xf32>,
    } else {
    }
    %c0 = arith.constant 0 : index
    %c0_1 = arith.constant 0 : index
    %3 = vector.load %arg7[%c0, %c0_1] : memref<16x32xf32, #tpu.memory_space<vmem>>, vector<16x32xf32>
    %c0_2 = arith.constant 0 : index
    %c0_3 = arith.constant 0 : index
    %4 = vector.load %arg3[%c0_2, %c0_3] : memref<16x32xbf16, #tpu.memory_space<vmem>>, vector<16x32xbf16>
    %c0_4 = arith.constant 0 : index
    %c0_5 = arith.constant 0 : index
    %5 = vector.load %arg4[%c0_4, %c0_5] : memref<32x32xbf16, #tpu.memory_space<vmem>>, vector<32x32xbf16>
    %cst = arith.constant dense<0.000000e+00> : vector<16x32xf32>
    %6 = tpu.matmul %4, %5, %cst {dimension_numbers = #tpu.dot_dimension_numbers<[1], [0], [0], [1], [0, 0, 1, 1], [], []>} : vector<16x32xbf16>, vector<32x32xbf16>, vector<16x32xf32> -> vector<16x32xf32>
    %7 = arith.addf %3, %6 : vector<16x32xf32>
    %c0_6 = arith.constant 0 : index
    %c0_7 = arith.constant 0 : index
    %8 = vector.load %arg7[%c0_6, %c0_7] : memref<16x32xf32, #tpu.memory_space<vmem>>, vector<16x32xf32>
    tpu.vector_store %arg7[%c0_6, %c0_7], %7 {strides = array<i32>} : memref<16x32xf32, #tpu.memory_space<vmem>>, vector<16x32xf32>,
    %c0_i32_8 = arith.constant 0 : i32
    %9 = arith.cmpi eq, %arg2, %c0_i32_8 : i32
    %10 = arith.extui %9 : i1 to i32
    %c0_i32_9 = arith.constant 0 : i32
    %11 = arith.cmpi ne, %10, %c0_i32_9 : i32
    scf.if %11 {
      %c0_10 = arith.constant 0 : index
      %c0_11 = arith.constant 0 : index
      %12 = vector.load %arg7[%c0_10, %c0_11] : memref<16x32xf32, #tpu.memory_space<vmem>>, vector<16x32xf32>
      %c0_12 = arith.constant 0 : index
      %c0_13 = arith.constant 0 : index
      %13 = vector.load %arg5[%c0_12, %c0_13] : memref<16x32xbf16, #tpu.memory_space<vmem>>, vector<16x32xbf16>
      %14 = arith.extf %13 : vector<16x32xbf16> to vector<16x32xf32>
      %15 = arith.addf %12, %14 : vector<16x32xf32>
      %16 = arith.truncf %15 : vector<16x32xf32> to vector<16x32xbf16>
      %c0_14 = arith.constant 0 : index
      %c0_15 = arith.constant 0 : index
      %17 = vector.load %arg6[%c0_14, %c0_15] : memref<16x32xbf16, #tpu.memory_space<vmem>>, vector<16x32xbf16>
      tpu.vector_store %arg6[%c0_14, %c0_15], %16 {strides = array<i32>} : memref<16x32xbf16, #tpu.memory_space<vmem>>, vector<16x32xbf16>,
    } else {
    }
    return
  }
  func.func @transform_0(%arg0: i32, %arg1: i32, %arg2: i32) -> (i32, i32) {
    %c0_i32 = arith.constant 0 : i32
    return %arg0, %arg2 : i32, i32
  }
  func.func @transform_1(%arg0: i32, %arg1: i32, %arg2: i32) -> (i32, i32) {
    %c0_i32 = arith.constant 0 : i32
    return %arg2, %arg1 : i32, i32
  }
  func.func @transform_2(%arg0: i32, %arg1: i32, %arg2: i32) -> (i32, i32) {
    %c0_i32 = arith.constant 0 : i32
    return %arg0, %arg1 : i32, i32
  }
  func.func @transform_3(%arg0: i32, %arg1: i32, %arg2: i32) -> (i32, i32) {
    %c0_i32 = arith.constant 0 : i32
    return %arg0, %arg1 : i32, i32
  }
}

module attributes {stable_mosaic.version = 11 : i64} {
  func.func @_ffn_kernel(%arg0: i32, %arg1: i32, %arg2: memref<16x32xbf16, #tpu.memory_space<vmem>>, %arg3: memref<1x32xf32, #tpu.memory_space<vmem>>, %arg4: memref<32x64xbf16, #tpu.memory_space<vmem>>, %arg5: memref<32x64xbf16, #tpu.memory_space<vmem>>, %arg6: memref<64x32xbf16, #tpu.memory_space<vmem>>, %arg7: memref<16x32xbf16, #tpu.memory_space<vmem>>, %arg8: memref<16x32xf32, #tpu.memory_space<vmem>>) attributes {dimension_semantics = [#tpu.dimension_semantics<parallel>, #tpu.dimension_semantics<arbitrary>], iteration_bounds = array<i64: 1, 1>, scalar_prefetch = 0 : i64, scratch_operands = 1 : i64, tpu.core_type = #tpu.core_type<tc>, window_params = [{transform_indices = @transform_0, window_bounds = array<i64: 16, 32>}, {pipeline_mode = #tpu.pipeline_mode<synchronous>, transform_indices = @transform_1, window_bounds = array<i64: 1, 32>}, {transform_indices = @transform_2, window_bounds = array<i64: 32, 64>}, {transform_indices = @transform_3, window_bounds = array<i64: 32, 64>}, {transform_indices = @transform_4, window_bounds = array<i64: 64, 32>}, {transform_indices = @transform_5, window_bounds = array<i64: 16, 32>}]} {
    %c0_i32 = arith.constant 0 : i32
    %0 = arith.cmpi eq, %arg1, %c0_i32 : i32
    %1 = arith.extui %0 : i1 to i32
    %c0_i32_0 = arith.constant 0 : i32
    %2 = arith.cmpi ne, %1, %c0_i32_0 : i32
    scf.if %2 {
      %cst_22 = arith.constant 0.000000e+00 : f32
      %39 = vector.broadcast %cst_22 : f32 to vector<16x32xf32>
      %c0_23 = arith.constant 0 : index
      %c0_24 = arith.constant 0 : index
      %40 = vector.load %arg8[%c0_23, %c0_24] : memref<16x32xf32, #tpu.memory_space<vmem>>, vector<16x32xf32>
      tpu.vector_store %arg8[%c0_23, %c0_24], %39 {strides = array<i32>} : memref<16x32xf32, #tpu.memory_space<vmem>>, vector<16x32xf32>,
    } else {
    }
    %c0 = arith.constant 0 : index
    %c0_1 = arith.constant 0 : index
    %3 = vector.load %arg2[%c0, %c0_1] : memref<16x32xbf16, #tpu.memory_space<vmem>>, vector<16x32xbf16>
    %4 = arith.extf %3 : vector<16x32xbf16> to vector<16x32xf32>
    %5 = arith.mulf %4, %4 : vector<16x32xf32>
    %cst = arith.constant dense<0.000000e+00> : vector<16xf32>
    %6 = vector.multi_reduction <add>, %5, %cst [1] : vector<16x32xf32> to vector<16xf32>
    %7 = vector.shape_cast %6 : vector<16xf32> to vector<16x1xf32>
    %cst_2 = arith.constant 3.200000e+01 : f32
    %8 = vector.broadcast %cst_2 : f32 to vector<16x1xf32>
    %9 = arith.divf %7, %8 : vector<16x1xf32>
    %cst_3 = arith.constant 9.99999997E-7 : f32
    %10 = vector.broadcast %cst_3 : f32 to vector<16x1xf32>
    %11 = arith.addf %9, %10 : vector<16x1xf32>
    %12 = math.rsqrt %11 : vector<16x1xf32>
    %13 = vector.broadcast %12 : vector<16x1xf32> to vector<16x32xf32>
    %14 = arith.mulf %4, %13 : vector<16x32xf32>
    %c0_4 = arith.constant 0 : index
    %c0_5 = arith.constant 0 : index
    %15 = vector.load %arg3[%c0_4, %c0_5] : memref<1x32xf32, #tpu.memory_space<vmem>>, vector<1x32xf32>
    %16 = vector.broadcast %15 : vector<1x32xf32> to vector<16x32xf32>
    %17 = arith.mulf %14, %16 : vector<16x32xf32>
    %18 = arith.truncf %17 : vector<16x32xf32> to vector<16x32xbf16>
    %c0_6 = arith.constant 0 : index
    %c0_7 = arith.constant 0 : index
    %19 = vector.load %arg4[%c0_6, %c0_7] : memref<32x64xbf16, #tpu.memory_space<vmem>>, vector<32x64xbf16>
    %cst_8 = arith.constant dense<0.000000e+00> : vector<16x64xf32>
    %20 = tpu.matmul %18, %19, %cst_8 {dimension_numbers = #tpu.dot_dimension_numbers<[1], [0], [0], [1], [0, 0, 1, 1], [], []>} : vector<16x32xbf16>, vector<32x64xbf16>, vector<16x64xf32> -> vector<16x64xf32>
    %c0_9 = arith.constant 0 : index
    %c0_10 = arith.constant 0 : index
    %21 = vector.load %arg5[%c0_9, %c0_10] : memref<32x64xbf16, #tpu.memory_space<vmem>>, vector<32x64xbf16>
    %cst_11 = arith.constant dense<0.000000e+00> : vector<16x64xf32>
    %22 = tpu.matmul %18, %21, %cst_11 {dimension_numbers = #tpu.dot_dimension_numbers<[1], [0], [0], [1], [0, 0, 1, 1], [], []>} : vector<16x32xbf16>, vector<32x64xbf16>, vector<16x64xf32> -> vector<16x64xf32>
    %23 = arith.negf %20 : vector<16x64xf32>
    %24 = math.exp %23 : vector<16x64xf32>
    %cst_12 = arith.constant 1.000000e+00 : f32
    %25 = vector.broadcast %cst_12 : f32 to vector<16x64xf32>
    %26 = arith.addf %25, %24 : vector<16x64xf32>
    %27 = arith.divf %25, %26 : vector<16x64xf32>
    %28 = arith.mulf %20, %27 : vector<16x64xf32>
    %29 = arith.mulf %28, %22 : vector<16x64xf32>
    %30 = arith.truncf %29 : vector<16x64xf32> to vector<16x64xbf16>
    %c0_13 = arith.constant 0 : index
    %c0_14 = arith.constant 0 : index
    %31 = vector.load %arg8[%c0_13, %c0_14] : memref<16x32xf32, #tpu.memory_space<vmem>>, vector<16x32xf32>
    %c0_15 = arith.constant 0 : index
    %c0_16 = arith.constant 0 : index
    %32 = vector.load %arg6[%c0_15, %c0_16] : memref<64x32xbf16, #tpu.memory_space<vmem>>, vector<64x32xbf16>
    %cst_17 = arith.constant dense<0.000000e+00> : vector<16x32xf32>
    %33 = tpu.matmul %30, %32, %cst_17 {dimension_numbers = #tpu.dot_dimension_numbers<[1], [0], [0], [1], [0, 0, 1, 1], [], []>} : vector<16x64xbf16>, vector<64x32xbf16>, vector<16x32xf32> -> vector<16x32xf32>
    %34 = arith.addf %31, %33 : vector<16x32xf32>
    %c0_18 = arith.constant 0 : index
    %c0_19 = arith.constant 0 : index
    %35 = vector.load %arg8[%c0_18, %c0_19] : memref<16x32xf32, #tpu.memory_space<vmem>>, vector<16x32xf32>
    tpu.vector_store %arg8[%c0_18, %c0_19], %34 {strides = array<i32>} : memref<16x32xf32, #tpu.memory_space<vmem>>, vector<16x32xf32>,
    %c0_i32_20 = arith.constant 0 : i32
    %36 = arith.cmpi eq, %arg1, %c0_i32_20 : i32
    %37 = arith.extui %36 : i1 to i32
    %c0_i32_21 = arith.constant 0 : i32
    %38 = arith.cmpi ne, %37, %c0_i32_21 : i32
    scf.if %38 {
      %c0_22 = arith.constant 0 : index
      %c0_23 = arith.constant 0 : index
      %39 = vector.load %arg8[%c0_22, %c0_23] : memref<16x32xf32, #tpu.memory_space<vmem>>, vector<16x32xf32>
      %40 = arith.addf %39, %4 : vector<16x32xf32>
      %41 = arith.truncf %40 : vector<16x32xf32> to vector<16x32xbf16>
      %c0_24 = arith.constant 0 : index
      %c0_25 = arith.constant 0 : index
      %42 = vector.load %arg7[%c0_24, %c0_25] : memref<16x32xbf16, #tpu.memory_space<vmem>>, vector<16x32xbf16>
      tpu.vector_store %arg7[%c0_24, %c0_25], %41 {strides = array<i32>} : memref<16x32xbf16, #tpu.memory_space<vmem>>, vector<16x32xbf16>,
    } else {
    }
    return
  }
  func.func @transform_0(%arg0: i32, %arg1: i32) -> (i32, i32) {
    %c0_i32 = arith.constant 0 : i32
    %c0_i32_0 = arith.constant 0 : i32
    return %arg0, %c0_i32 : i32, i32
  }
  func.func @transform_1(%arg0: i32, %arg1: i32) -> (i32, i32) {
    %c0_i32 = arith.constant 0 : i32
    %c0_i32_0 = arith.constant 0 : i32
    %c0_i32_1 = arith.constant 0 : i32
    return %c0_i32, %c0_i32_0 : i32, i32
  }
  func.func @transform_2(%arg0: i32, %arg1: i32) -> (i32, i32) {
    %c0_i32 = arith.constant 0 : i32
    %c0_i32_0 = arith.constant 0 : i32
    return %c0_i32, %arg1 : i32, i32
  }
  func.func @transform_3(%arg0: i32, %arg1: i32) -> (i32, i32) {
    %c0_i32 = arith.constant 0 : i32
    %c0_i32_0 = arith.constant 0 : i32
    return %c0_i32, %arg1 : i32, i32
  }
  func.func @transform_4(%arg0: i32, %arg1: i32) -> (i32, i32) {
    %c0_i32 = arith.constant 0 : i32
    %c0_i32_0 = arith.constant 0 : i32
    return %arg1, %c0_i32 : i32, i32
  }
  func.func @transform_5(%arg0: i32, %arg1: i32) -> (i32, i32) {
    %c0_i32 = arith.constant 0 : i32
    %c0_i32_0 = arith.constant 0 : i32
    return %arg0, %c0_i32 : i32, i32
  }
}

module attributes {stable_mosaic.version = 11 : i64} {
  func.func @_norm_matmul_kernel(%arg0: i32, %arg1: i32, %arg2: memref<16x32xbf16, #tpu.memory_space<vmem>>, %arg3: memref<1x32xf32, #tpu.memory_space<vmem>>, %arg4: memref<32x64xbf16, #tpu.memory_space<vmem>>, %arg5: memref<16x64xf32, #tpu.memory_space<vmem>>) attributes {dimension_semantics = [#tpu.dimension_semantics<parallel>, #tpu.dimension_semantics<parallel>], iteration_bounds = array<i64: 1, 1>, scalar_prefetch = 0 : i64, scratch_operands = 0 : i64, tpu.core_type = #tpu.core_type<tc>, window_params = [{transform_indices = @transform_0, window_bounds = array<i64: 16, 32>}, {pipeline_mode = #tpu.pipeline_mode<synchronous>, transform_indices = @transform_1, window_bounds = array<i64: 1, 32>}, {transform_indices = @transform_2, window_bounds = array<i64: 32, 64>}, {transform_indices = @transform_3, window_bounds = array<i64: 16, 64>}]} {
    %c0 = arith.constant 0 : index
    %c0_0 = arith.constant 0 : index
    %0 = vector.load %arg2[%c0, %c0_0] : memref<16x32xbf16, #tpu.memory_space<vmem>>, vector<16x32xbf16>
    %1 = arith.extf %0 : vector<16x32xbf16> to vector<16x32xf32>
    %2 = arith.mulf %1, %1 : vector<16x32xf32>
    %cst = arith.constant dense<0.000000e+00> : vector<16xf32>
    %3 = vector.multi_reduction <add>, %2, %cst [1] : vector<16x32xf32> to vector<16xf32>
    %4 = vector.shape_cast %3 : vector<16xf32> to vector<16x1xf32>
    %cst_1 = arith.constant 3.200000e+01 : f32
    %5 = vector.broadcast %cst_1 : f32 to vector<16x1xf32>
    %6 = arith.divf %4, %5 : vector<16x1xf32>
    %cst_2 = arith.constant 9.99999997E-7 : f32
    %7 = vector.broadcast %cst_2 : f32 to vector<16x1xf32>
    %8 = arith.addf %6, %7 : vector<16x1xf32>
    %9 = math.rsqrt %8 : vector<16x1xf32>
    %10 = vector.broadcast %9 : vector<16x1xf32> to vector<16x32xf32>
    %11 = arith.mulf %1, %10 : vector<16x32xf32>
    %c0_3 = arith.constant 0 : index
    %c0_4 = arith.constant 0 : index
    %12 = vector.load %arg3[%c0_3, %c0_4] : memref<1x32xf32, #tpu.memory_space<vmem>>, vector<1x32xf32>
    %13 = vector.broadcast %12 : vector<1x32xf32> to vector<16x32xf32>
    %14 = arith.mulf %11, %13 : vector<16x32xf32>
    %15 = arith.truncf %14 : vector<16x32xf32> to vector<16x32xbf16>
    %c0_5 = arith.constant 0 : index
    %c0_6 = arith.constant 0 : index
    %16 = vector.load %arg4[%c0_5, %c0_6] : memref<32x64xbf16, #tpu.memory_space<vmem>>, vector<32x64xbf16>
    %cst_7 = arith.constant dense<0.000000e+00> : vector<16x64xf32>
    %17 = tpu.matmul %15, %16, %cst_7 {dimension_numbers = #tpu.dot_dimension_numbers<[1], [0], [0], [1], [0, 0, 1, 1], [], []>} : vector<16x32xbf16>, vector<32x64xbf16>, vector<16x64xf32> -> vector<16x64xf32>
    %c0_8 = arith.constant 0 : index
    %c0_9 = arith.constant 0 : index
    %18 = vector.load %arg5[%c0_8, %c0_9] : memref<16x64xf32, #tpu.memory_space<vmem>>, vector<16x64xf32>
    tpu.vector_store %arg5[%c0_8, %c0_9], %17 {strides = array<i32>} : memref<16x64xf32, #tpu.memory_space<vmem>>, vector<16x64xf32>,
    return
  }
  func.func @transform_0(%arg0: i32, %arg1: i32) -> (i32, i32) {
    %c0_i32 = arith.constant 0 : i32
    %c0_i32_0 = arith.constant 0 : i32
    return %arg0, %c0_i32 : i32, i32
  }
  func.func @transform_1(%arg0: i32, %arg1: i32) -> (i32, i32) {
    %c0_i32 = arith.constant 0 : i32
    %c0_i32_0 = arith.constant 0 : i32
    %c0_i32_1 = arith.constant 0 : i32
    return %c0_i32, %c0_i32_0 : i32, i32
  }
  func.func @transform_2(%arg0: i32, %arg1: i32) -> (i32, i32) {
    %c0_i32 = arith.constant 0 : i32
    %c0_i32_0 = arith.constant 0 : i32
    return %c0_i32, %arg1 : i32, i32
  }
  func.func @transform_3(%arg0: i32, %arg1: i32) -> (i32, i32) {
    %c0_i32 = arith.constant 0 : i32
    return %arg0, %arg1 : i32, i32
  }
}

</mosaic_0001>

<llo_original>
// kernel: transformer_forward.11
$region0: #{transformer_forward.11}
  #allocation0 [shape = 'u32[]', space=smem, size = 0x4, offset = 0x4, fixed_abs, tag = 'smem constant byte address 0x4 - core index']
  #allocation1 [shape = 'u32[144,128]{1,0:T(1,128)}', space=vmem, size = 0x12000, scoped, tag = 'internal scratch']
  #allocation2 [shape = 'f32[16,32]{1,0:T(8,128)}', space=vmem, size = 0x2000, scoped, tag = 'scratch operand']
  %s0 = inlined_call_operand.vmem [shape: bf16[16,32], index: 0, kind: input, shape index: {}]
  %s1 = inlined_call_operand.vmem [shape: bf16[32,32], index: 1, kind: input, shape index: {}]
  %s2 = inlined_call_operand.vmem [shape: bf16[16,32], index: 2, kind: input, shape index: {}]
  %s3 = inlined_call_operand.vmem [shape: bf16[16,32], index: 3, kind: output, shape index: {}]
  %s4 = sld [smem:[#allocation0]]
  $region30: #{transformer_forward.11} parent=0
    _
  %s6 = ssub.s32 1, %s4
  %s7 = scalar_select 0, %s6, %s4
  // Predicated region
  $region2: #{transformer_forward.11} parent=0 // pred_check
    _
  $region3: #{transformer_forward.11} parent=0 // pred_check_branch
    %9 = sbr.rel (0) target = $region5
  $region4: #{transformer_forward.11} parent=0 // pred_region
    _
  $region5: #{transformer_forward.11} parent=0 // pred_fallthru
    _
  // Predicated region
  $region6: #{transformer_forward.11} parent=0 // pred_check
    _
  $region7: #{transformer_forward.11} parent=0 // pred_check_branch
    %11 = sbr.rel (0) target = $region9
  $region8: #{transformer_forward.11} parent=0 // pred_region
    _
  $region9: #{transformer_forward.11} parent=0 // pred_fallthru
    _
  // Predicated region
  $region10: #{transformer_forward.11} parent=0 // pred_check
    _
  $region11: #{transformer_forward.11} parent=0 // pred_check_branch
    %13 = sbr.rel (0) target = $region13
  $region12: #{transformer_forward.11} parent=0 // pred_region
    _
  $region13: #{transformer_forward.11} parent=0 // pred_fallthru
    _
  %p15 = scmp.eq.s32.totalorder 0, 0
  // Predicated region
  $region14: #{transformer_forward.11} parent=0 // pred_check
    %p16 = pneg %p15
  $region15: #{transformer_forward.11} parent=0 // pred_check_branch
    %18 = sbr.rel (%p16) target = $region17
  $region16: #{transformer_forward.11} parent=0 // pred_region
    %vm19 = vcmask 261120
    %20 = vst.msk [vmem:[#allocation2] sm:$0xff] %vm19, 0.0
    %21 = vst.msk [vmem:[#allocation2 + $0x8] sm:$0xff] %vm19, 0.0
  $region17: #{transformer_forward.11} parent=0 // pred_fallthru
    _
  %v22 = vld [vmem:[#allocation2] sm:$0xff]
  %v23 = vld [vmem:[#allocation2 + $0x8] sm:$0xff]
  %v24 = vld [vmem:[%s0] sm:$0xf]
  %v25 = vld [vmem:[%s0 + $0x4] sm:$0xf]
  %v26 = vld [vmem:[%s1] sm:$0xf]
  %v27 = vld [vmem:[%s1 + $0x4] sm:$0xf]
  %v28 = vld [vmem:[%s1 + $0x8] sm:$0xf]
  %v29 = vld [vmem:[%s1 + $0xc] sm:$0xf]
  %v32 = vunpack.c.l.b16 %v24
  %v33 = vunpack.c.l.b16 %v25
  %v34 = vpack.c.b16 %v33, %v32
  %v39 = vunpack.c.l.b16 %v26
  %v40 = vunpack.c.l.b16 %v27
  %v41 = vunpack.c.l.b16 %v28
  %v42 = vunpack.c.l.b16 %v29
  %v43 = vpack.c.b16 %v40, %v39
  %v44 = vpack.c.b16 %v42, %v41
  %vm47 = vcmask 261120
  %v49 = vsel %vm47, %v34, 0
  %51 = vmatprep.subr.bf16.mxu0 0
  %52 = vmatpush1.bf16.msra.mxu0 0
  %53 = vmatprep.subr.bf16.mxu0 0
  %54 = vmatpush1.bf16.msra.mxu0 0
  %55 = vmatprep.subr.bf16.mxu0 0
  %56 = vmatpush1.bf16.msra.mxu0 0
  %57 = vmatprep.subr.bf16.mxu0 0
  %58 = vmatpush1.bf16.msra.mxu0 0
  %59 = vmatprep.subr.bf16.mxu0 0
  %60 = vmatpush1.bf16.msra.mxu0 0
  %61 = vmatprep.subr.bf16.mxu0 0
  %62 = vmatpush1.bf16.msra.mxu0 0
  %63 = vmatprep.subr.bf16.mxu0 0
  %64 = vmatpush1.bf16.msra.mxu0 %v44
  %65 = vmatprep.subr.bf16.mxu0 0
  %66 = vmatpush1.bf16.msra.mxu0 %v43
  %67 = vmatprep.subr.bf16.mxu0 0
  %68 = vmatpush2.bf16.msra.mxu0 0
  %69 = vmatprep.subr.bf16.mxu0 0
  %70 = vmatpush2.bf16.msra.mxu0 0
  %71 = vmatprep.subr.bf16.mxu0 0
  %72 = vmatpush2.bf16.msra.mxu0 0
  %73 = vmatprep.subr.bf16.mxu0 0
  %74 = vmatpush2.bf16.msra.mxu0 0
  %75 = vmatprep.subr.bf16.mxu0 0
  %76 = vmatpush2.bf16.msra.mxu0 0
  %77 = vmatprep.subr.bf16.mxu0 0
  %78 = vmatpush2.bf16.msra.mxu0 0
  %79 = vmatprep.subr.bf16.mxu0 0
  %80 = vmatpush2.bf16.msra.mxu0 0
  %81 = vmatprep.subr.bf16.mxu0 0
  %82 = vmatpush2.bf16.msra.mxu0 0
  %83 = vmatprep.mubr.bf16.mxu0 0
  %84 = vmatmul.mubr.bf16.gmra.mxu0 %v49
  %v85 = vpop.f32.mrf.mxu0
  %v86 = vadd.f32 0.0, %v85
  %v87 = vpop.f32.mrf.mxu0
  %v88 = vpop.f32.mrf.mxu0
  %v89 = vadd.f32 0.0, %v88
  %v90 = vpop.f32.mrf.mxu0
  %91 = vdwg.mxu0
  %v92 = vadd.f32 %v22, %v86
  %v93 = vadd.f32 %v23, %v89
  %94 = vst.msk [vmem:[#allocation2] sm:$0xff] %vm47, %v92
  %95 = vst.msk [vmem:[#allocation2 + $0x8] sm:$0xff] %vm47, %v93
  // Predicated region
  $region18: #{transformer_forward.11} parent=0 // pred_check
    %p96 = pneg %p15
  $region19: #{transformer_forward.11} parent=0 // pred_check_branch
    %98 = sbr.rel (%p96) target = $region21
  $region20: #{transformer_forward.11} parent=0 // pred_region
    %v99 = vld [vmem:[#allocation2] sm:$0xff]
    %v100 = vld [vmem:[#allocation2 + $0x8] sm:$0xff]
    %v101 = vld [vmem:[%s2] sm:$0xf]
    %v102 = vld [vmem:[%s2 + $0x4] sm:$0xf]
    %v103 = vunpack.c.l.bf16 %v101
    %v104 = vunpack.c.l.bf16 %v102
    %v105 = vadd.f32 %v99, %v103
    %v106 = vadd.f32 %v100, %v104
    %v107 = vpack.c.bf16 %v106, %v105
    %v109 = vunpack.c.l.b16 %v107
    %v110 = vunpack.c.h.b16 %v107
    %v111 = vpack.c.b16 %v109, %v109
    %v112 = vpack.c.b16 %v110, %v110
    %vm115 = vcmask 257024
    %116 = vst.msk [vmem:[%s3] sm:$0xf] %vm115, %v111
    %117 = vst.msk [vmem:[%s3 + $0x4] sm:$0xf] %vm115, %v112
  $region21: #{transformer_forward.11} parent=0 // pred_fallthru
    _
  // Predicated region
  $region22: #{transformer_forward.11} parent=0 // pred_check
    _
  $region23: #{transformer_forward.11} parent=0 // pred_check_branch
    %119 = sbr.rel (0) target = $region25
  $region24: #{transformer_forward.11} parent=0 // pred_region
    _
  $region25: #{transformer_forward.11} parent=0 // pred_fallthru
    _
  // Predicated region
  $region26: #{transformer_forward.11} parent=0 // pred_check
    _
  $region27: #{transformer_forward.11} parent=0 // pred_check_branch
    %121 = sbr.rel (0) target = $region29
  $region28: #{transformer_forward.11} parent=0 // pred_region
    _
  $region29: #{transformer_forward.11} parent=0 // pred_fallthru
    _

// kernel: transformer_forward.9
$region0: #{transformer_forward.9}
  #allocation0 [shape = 'u32[]', space=smem, size = 0x4, offset = 0x4, fixed_abs, tag = 'smem constant byte address 0x4 - core index']
  #allocation1 [shape = 'u32[144,128]{1,0:T(1,128)}', space=vmem, size = 0x12000, scoped, tag = 'internal scratch']
  %s0 = inlined_call_operand.vmem [shape: bf16[16,32], index: 0, kind: input, shape index: {}]
  %s1 = inlined_call_operand.vmem [shape: f32[1,32], index: 1, kind: input, shape index: {}]
  %s2 = inlined_call_operand.vmem [shape: bf16[32,96], index: 2, kind: input, shape index: {}]
  %s3 = inlined_call_operand.vmem [shape: bf16[16,96], index: 3, kind: output, shape index: {}]
  %s4 = sld [smem:[#allocation0]]
  $region22: #{transformer_forward.9} parent=0
    _
  %s6 = ssub.s32 1, %s4
  %s7 = scalar_select 0, %s6, %s4
  // Predicated region
  $region2: #{transformer_forward.9} parent=0 // pred_check
    _
  $region3: #{transformer_forward.9} parent=0 // pred_check_branch
    %9 = sbr.rel (0) target = $region5
  $region4: #{transformer_forward.9} parent=0 // pred_region
    _
  $region5: #{transformer_forward.9} parent=0 // pred_fallthru
    _
  // Predicated region
  $region6: #{transformer_forward.9} parent=0 // pred_check
    _
  $region7: #{transformer_forward.9} parent=0 // pred_check_branch
    %11 = sbr.rel (0) target = $region9
  $region8: #{transformer_forward.9} parent=0 // pred_region
    _
  $region9: #{transformer_forward.9} parent=0 // pred_fallthru
    _
  // Predicated region
  $region10: #{transformer_forward.9} parent=0 // pred_check
    _
  $region11: #{transformer_forward.9} parent=0 // pred_check_branch
    %13 = sbr.rel (0) target = $region13
  $region12: #{transformer_forward.9} parent=0 // pred_region
    _
  $region13: #{transformer_forward.9} parent=0 // pred_fallthru
    _
  %v15 = vld [vmem:[%s0] sm:$0xf]
  %v16 = vld [vmem:[%s0 + $0x4] sm:$0xf]
  %v17 = vunpack.c.l.bf16 %v15
  %v18 = vunpack.c.l.bf16 %v16
  %v19 = vmul.f32 %v17, %v17
  %v20 = vmul.f32 %v18, %v18
  %vm21 = vcmask 261120
  %v22 = vsel %vm21, %v19, 0.0
  %23 = vadd.xlane.f32.xlu0 %v22
  %v24 = vpop.xlane.xlu0 %23
  %v25 = vsel %vm21, %v20, 0.0
  %26 = vadd.xlane.f32.xlu0 %v25
  %v27 = vpop.xlane.xlu0 %26
  %v28 = vrcp.pop 32.0
  %v29 = vmul.f32 %v24, %v28
  %v30 = vmul.f32 %v27, %v28
  %v31 = vadd.f32 %v29, 1e-06
  %v32 = vadd.f32 %v30, 1e-06
  %v33 = vrsqrt.pop %v31
  %v34 = vrsqrt.pop %v32
  %v35 = vmul.f32 %v17, %v33
  %v36 = vmul.f32 %v18, %v34
  %v37 = vld [vmem:[%s1] sm:$0x1]
  %v39 = vlaneseq
  %v40 = vshrl.u32 %v39, 7
  %v41 = vsub.s32 0, %v40
  %v42 = vrot.slane %v37, %v41
  %v44 = vmul.f32 %v35, %v42
  %v45 = vmul.f32 %v36, %v42
  %v46 = vpack.c.bf16 %v45, %v44
  %v47 = vld [vmem:[%s2] sm:$0xf]
  %v48 = vld [vmem:[%s2 + $0x4] sm:$0xf]
  %v49 = vld [vmem:[%s2 + $0x8] sm:$0xf]
  %v50 = vld [vmem:[%s2 + $0xc] sm:$0xf]
  %v55 = vunpack.c.l.b16 %v47
  %v56 = vunpack.c.l.b16 %v48
  %v57 = vunpack.c.l.b16 %v49
  %v58 = vunpack.c.l.b16 %v50
  %v59 = vpack.c.b16 %v56, %v55
  %v60 = vpack.c.b16 %v58, %v57
  %v64 = vsel %vm21, %v46, 0
  %66 = vmatprep.subr.bf16.mxu0 0
  %67 = vmatpush1.bf16.msra.mxu0 0
  %68 = vmatprep.subr.bf16.mxu0 0
  %69 = vmatpush1.bf16.msra.mxu0 0
  %70 = vmatprep.subr.bf16.mxu0 0
  %71 = vmatpush1.bf16.msra.mxu0 0
  %72 = vmatprep.subr.bf16.mxu0 0
  %73 = vmatpush1.bf16.msra.mxu0 0
  %74 = vmatprep.subr.bf16.mxu0 0
  %75 = vmatpush1.bf16.msra.mxu0 0
  %76 = vmatprep.subr.bf16.mxu0 0
  %77 = vmatpush1.bf16.msra.mxu0 0
  %78 = vmatprep.subr.bf16.mxu0 0
  %79 = vmatpush1.bf16.msra.mxu0 %v60
  %80 = vmatprep.subr.bf16.mxu0 0
  %81 = vmatpush1.bf16.msra.mxu0 %v59
  %82 = vmatprep.subr.bf16.mxu0 0
  %83 = vmatpush2.bf16.msra.mxu0 0
  %84 = vmatprep.subr.bf16.mxu0 0
  %85 = vmatpush2.bf16.msra.mxu0 0
  %86 = vmatprep.subr.bf16.mxu0 0
  %87 = vmatpush2.bf16.msra.mxu0 0
  %88 = vmatprep.subr.bf16.mxu0 0
  %89 = vmatpush2.bf16.msra.mxu0 0
  %90 = vmatprep.subr.bf16.mxu0 0
  %91 = vmatpush2.bf16.msra.mxu0 0
  %92 = vmatprep.subr.bf16.mxu0 0
  %93 = vmatpush2.bf16.msra.mxu0 0
  %94 = vmatprep.subr.bf16.mxu0 0
  %95 = vmatpush2.bf16.msra.mxu0 0
  %96 = vmatprep.subr.bf16.mxu0 0
  %97 = vmatpush2.bf16.msra.mxu0 0
  %98 = vmatprep.mubr.bf16.mxu0 0
  %99 = vmatmul.mubr.bf16.gmra.mxu0 %v64
  %v100 = vpop.f32.mrf.mxu0
  %v101 = vadd.f32 0.0, %v100
  %v102 = vpop.f32.mrf.mxu0
  %v103 = vpop.f32.mrf.mxu0
  %v104 = vadd.f32 0.0, %v103
  %v105 = vpop.f32.mrf.mxu0
  %106 = vdwg.mxu0
  %v107 = vpack.c.bf16 %v104, %v101
  %v109 = vunpack.c.l.b16 %v107
  %v110 = vunpack.c.h.b16 %v107
  %v111 = vpack.c.b16 %v109, %v109
  %v112 = vpack.c.b16 %v110, %v110
  %vm115 = vcmask 781312
  %116 = vst.msk [vmem:[%s3] sm:$0xf] %vm115, %v111
  %117 = vst.msk [vmem:[%s3 + $0x4] sm:$0xf] %vm115, %v112
  // Predicated region
  $region14: #{transformer_forward.9} parent=0 // pred_check
    _
  $region15: #{transformer_forward.9} parent=0 // pred_check_branch
    %119 = sbr.rel (0) target = $region17
  $region16: #{transformer_forward.9} parent=0 // pred_region
    _
  $region17: #{transformer_forward.9} parent=0 // pred_fallthru
    _
  // Predicated region
  $region18: #{transformer_forward.9} parent=0 // pred_check
    _
  $region19: #{transformer_forward.9} parent=0 // pred_check_branch
    %121 = sbr.rel (0) target = $region21
  $region20: #{transformer_forward.9} parent=0 // pred_region
    _
  $region21: #{transformer_forward.9} parent=0 // pred_fallthru
    _

// kernel: transformer_forward.12
$region0: #{transformer_forward.12}
  #allocation0 [shape = 'u32[]', space=smem, size = 0x4, offset = 0x4, fixed_abs, tag = 'smem constant byte address 0x4 - core index']
  #allocation1 [shape = 'u32[144,128]{1,0:T(1,128)}', space=vmem, size = 0x12000, scoped, tag = 'internal scratch']
  #allocation2 [shape = 'f32[16,32]{1,0:T(8,128)}', space=vmem, size = 0x2000, scoped, tag = 'scratch operand']
  %s0 = inlined_call_operand.vmem [shape: bf16[16,32], index: 0, kind: input, shape index: {}]
  %s1 = inlined_call_operand.vmem [shape: f32[1,32], index: 1, kind: input, shape index: {}]
  %s2 = inlined_call_operand.vmem [shape: bf16[32,64], index: 2, kind: input, shape index: {}]
  %s3 = inlined_call_operand.vmem [shape: bf16[32,64], index: 3, kind: input, shape index: {}]
  %s4 = inlined_call_operand.vmem [shape: bf16[64,32], index: 4, kind: input, shape index: {}]
  %s5 = inlined_call_operand.vmem [shape: bf16[16,32], index: 5, kind: output, shape index: {}]
  %s6 = sld [smem:[#allocation0]]
  $region38: #{transformer_forward.12} parent=0
    _
  %s8 = ssub.s32 1, %s6
  %s9 = scalar_select 0, %s8, %s6
  // Predicated region
  $region2: #{transformer_forward.12} parent=0 // pred_check
    _
  $region3: #{transformer_forward.12} parent=0 // pred_check_branch
    %11 = sbr.rel (0) target = $region5
  $region4: #{transformer_forward.12} parent=0 // pred_region
    _
  $region5: #{transformer_forward.12} parent=0 // pred_fallthru
    _
  // Predicated region
  $region6: #{transformer_forward.12} parent=0 // pred_check
    _
  $region7: #{transformer_forward.12} parent=0 // pred_check_branch
    %13 = sbr.rel (0) target = $region9
  $region8: #{transformer_forward.12} parent=0 // pred_region
    _
  $region9: #{transformer_forward.12} parent=0 // pred_fallthru
    _
  // Predicated region
  $region10: #{transformer_forward.12} parent=0 // pred_check
    _
  $region11: #{transformer_forward.12} parent=0 // pred_check_branch
    %15 = sbr.rel (0) target = $region13
  $region12: #{transformer_forward.12} parent=0 // pred_region
    _
  $region13: #{transformer_forward.12} parent=0 // pred_fallthru
    _
  // Predicated region
  $region14: #{transformer_forward.12} parent=0 // pred_check
    _
  $region15: #{transformer_forward.12} parent=0 // pred_check_branch
    %17 = sbr.rel (0) target = $region17
  $region16: #{transformer_forward.12} parent=0 // pred_region
    _
  $region17: #{transformer_forward.12} parent=0 // pred_fallthru
    _
  // Predicated region
  $region18: #{transformer_forward.12} parent=0 // pred_check
    _
  $region19: #{transformer_forward.12} parent=0 // pred_check_branch
    %19 = sbr.rel (0) target = $region21
  $region20: #{transformer_forward.12} parent=0 // pred_region
    _
  $region21: #{transformer_forward.12} parent=0 // pred_fallthru
    _
  %p21 = scmp.eq.s32.totalorder 0, 0
  // Predicated region
  $region22: #{transformer_forward.12} parent=0 // pred_check
    %p22 = pneg %p21
  $region23: #{transformer_forward.12} parent=0 // pred_check_branch
    %24 = sbr.rel (%p22) target = $region25
  $region24: #{transformer_forward.12} parent=0 // pred_region
    %vm25 = vcmask 261120
    %26 = vst.msk [vmem:[#allocation2] sm:$0xff] %vm25, 0.0
    %27 = vst.msk [vmem:[#allocation2 + $0x8] sm:$0xff] %vm25, 0.0
  $region25: #{transformer_forward.12} parent=0 // pred_fallthru
    _
  %v28 = vld [vmem:[%s0] sm:$0xf]
  %v29 = vld [vmem:[%s0 + $0x4] sm:$0xf]
  %v30 = vunpack.c.l.bf16 %v28
  %v31 = vunpack.c.l.bf16 %v29
  %v32 = vmul.f32 %v30, %v30
  %v33 = vmul.f32 %v31, %v31
  %vm34 = vcmask 261120
  %v35 = vsel %vm34, %v32, 0.0
  %36 = vadd.xlane.f32.xlu0 %v35
  %v37 = vpop.xlane.xlu0 %36
  %v38 = vsel %vm34, %v33, 0.0
  %39 = vadd.xlane.f32.xlu0 %v38
  %v40 = vpop.xlane.xlu0 %39
  %v41 = vrcp.pop 32.0
  %v42 = vmul.f32 %v37, %v41
  %v43 = vmul.f32 %v40, %v41
  %v44 = vadd.f32 %v42, 1e-06
  %v45 = vadd.f32 %v43, 1e-06
  %v46 = vrsqrt.pop %v44
  %v47 = vrsqrt.pop %v45
  %v48 = vmul.f32 %v30, %v46
  %v49 = vmul.f32 %v31, %v47
  %v50 = vld [vmem:[%s1] sm:$0x1]
  %v52 = vlaneseq
  %v53 = vshrl.u32 %v52, 7
  %v54 = vsub.s32 0, %v53
  %v55 = vrot.slane %v50, %v54
  %v57 = vmul.f32 %v48, %v55
  %v58 = vmul.f32 %v49, %v55
  %v59 = vpack.c.bf16 %v58, %v57
  %v60 = vld [vmem:[%s2] sm:$0xf]
  %v61 = vld [vmem:[%s2 + $0x4] sm:$0xf]
  %v62 = vld [vmem:[%s2 + $0x8] sm:$0xf]
  %v63 = vld [vmem:[%s2 + $0xc] sm:$0xf]
  %v68 = vunpack.c.l.b16 %v60
  %v69 = vunpack.c.l.b16 %v61
  %v70 = vunpack.c.l.b16 %v62
  %v71 = vunpack.c.l.b16 %v63
  %v72 = vpack.c.b16 %v69, %v68
  %v73 = vpack.c.b16 %v71, %v70
  %v77 = vsel %vm34, %v59, 0
  %79 = vmatprep.subr.bf16.mxu0 0
  %80 = vmatpush1.bf16.msra.mxu0 0
  %81 = vmatprep.subr.bf16.mxu0 0
  %82 = vmatpush1.bf16.msra.mxu0 0
  %83 = vmatprep.subr.bf16.mxu0 0
  %84 = vmatpush1.bf16.msra.mxu0 0
  %85 = vmatprep.subr.bf16.mxu0 0
  %86 = vmatpush1.bf16.msra.mxu0 0
  %87 = vmatprep.subr.bf16.mxu0 0
  %88 = vmatpush1.bf16.msra.mxu0 0
  %89 = vmatprep.subr.bf16.mxu0 0
  %90 = vmatpush1.bf16.msra.mxu0 0
  %91 = vmatprep.subr.bf16.mxu0 0
  %92 = vmatpush1.bf16.msra.mxu0 %v73
  %93 = vmatprep.subr.bf16.mxu0 0
  %94 = vmatpush1.bf16.msra.mxu0 %v72
  %95 = vmatprep.subr.bf16.mxu0 0
  %96 = vmatpush2.bf16.msra.mxu0 0
  %97 = vmatprep.subr.bf16.mxu0 0
  %98 = vmatpush2.bf16.msra.mxu0 0
  %99 = vmatprep.subr.bf16.mxu0 0
  %100 = vmatpush2.bf16.msra.mxu0 0
  %101 = vmatprep.subr.bf16.mxu0 0
  %102 = vmatpush2.bf16.msra.mxu0 0
  %103 = vmatprep.subr.bf16.mxu0 0
  %104 = vmatpush2.bf16.msra.mxu0 0
  %105 = vmatprep.subr.bf16.mxu0 0
  %106 = vmatpush2.bf16.msra.mxu0 0
  %107 = vmatprep.subr.bf16.mxu0 0
  %108 = vmatpush2.bf16.msra.mxu0 0
  %109 = vmatprep.subr.bf16.mxu0 0
  %110 = vmatpush2.bf16.msra.mxu0 0
  %111 = vmatprep.mubr.bf16.mxu0 0
  %112 = vmatmul.mubr.bf16.gmra.mxu0 %v77
  %v113 = vpop.f32.mrf.mxu0
  %v114 = vadd.f32 0.0, %v113
  %v115 = vpop.f32.mrf.mxu0
  %v116 = vpop.f32.mrf.mxu0
  %v117 = vadd.f32 0.0, %v116
  %v118 = vpop.f32.mrf.mxu0
  %119 = vdwg.mxu0
  %v120 = vld [vmem:[%s3] sm:$0xf]
  %v121 = vld [vmem:[%s3 + $0x4] sm:$0xf]
  %v122 = vld [vmem:[%s3 + $0x8] sm:$0xf]
  %v123 = vld [vmem:[%s3 + $0xc] sm:$0xf]
  %v128 = vunpack.c.l.b16 %v120
  %v129 = vunpack.c.l.b16 %v121
  %v130 = vunpack.c.l.b16 %v122
  %v131 = vunpack.c.l.b16 %v123
  %v132 = vpack.c.b16 %v129, %v128
  %v133 = vpack.c.b16 %v131, %v130
  %136 = vmatprep.subr.bf16.mxu0 0
  %137 = vmatpush1.bf16.msra.mxu0 0
  %138 = vmatprep.subr.bf16.mxu0 0
  %139 = vmatpush1.bf16.msra.mxu0 0
  %140 = vmatprep.subr.bf16.mxu0 0
  %141 = vmatpush1.bf16.msra.mxu0 0
  %142 = vmatprep.subr.bf16.mxu0 0
  %143 = vmatpush1.bf16.msra.mxu0 0
  %144 = vmatprep.subr.bf16.mxu0 0
  %145 = vmatpush1.bf16.msra.mxu0 0
  %146 = vmatprep.subr.bf16.mxu0 0
  %147 = vmatpush1.bf16.msra.mxu0 0
  %148 = vmatprep.subr.bf16.mxu0 0
  %149 = vmatpush1.bf16.msra.mxu0 %v133
  %150 = vmatprep.subr.bf16.mxu0 0
  %151 = vmatpush1.bf16.msra.mxu0 %v132
  %152 = vmatprep.subr.bf16.mxu0 0
  %153 = vmatpush2.bf16.msra.mxu0 0
  %154 = vmatprep.subr.bf16.mxu0 0
  %155 = vmatpush2.bf16.msra.mxu0 0
  %156 = vmatprep.subr.bf16.mxu0 0
  %157 = vmatpush2.bf16.msra.mxu0 0
  %158 = vmatprep.subr.bf16.mxu0 0
  %159 = vmatpush2.bf16.msra.mxu0 0
  %160 = vmatprep.subr.bf16.mxu0 0
  %161 = vmatpush2.bf16.msra.mxu0 0
  %162 = vmatprep.subr.bf16.mxu0 0
  %163 = vmatpush2.bf16.msra.mxu0 0
  %164 = vmatprep.subr.bf16.mxu0 0
  %165 = vmatpush2.bf16.msra.mxu0 0
  %166 = vmatprep.subr.bf16.mxu0 0
  %167 = vmatpush2.bf16.msra.mxu0 0
  %168 = vmatprep.mubr.bf16.mxu0 0
  %169 = vmatmul.mubr.bf16.gmra.mxu0 %v77
  %v170 = vpop.f32.mrf.mxu0
  %v171 = vadd.f32 0.0, %v170
  %v172 = vpop.f32.mrf.mxu0
  %v173 = vpop.f32.mrf.mxu0
  %v174 = vadd.f32 0.0, %v173
  %v175 = vpop.f32.mrf.mxu0
  %176 = vdwg.mxu0
  %v177 = vxor.u32 %v114, 2147483648
  %v178 = vxor.u32 %v117, 2147483648
  %v179 = vmul.f32 %v177, 1.442695
  %v180 = vpow.pop %v179
  %v181 = vmul.f32 %v178, 1.442695
  %v182 = vpow.pop %v181
  %v183 = vadd.f32 %v180, 1.0
  %v184 = vadd.f32 %v182, 1.0
  %v185 = vrcp.pop %v183
  %v186 = vmul.f32 1.0, %v185
  %v187 = vrcp.pop %v184
  %v188 = vmul.f32 1.0, %v187
  %v189 = vmul.f32 %v114, %v186
  %v190 = vmul.f32 %v117, %v188
  %v191 = vmul.f32 %v189, %v171
  %v192 = vmul.f32 %v190, %v174
  %v193 = vpack.c.bf16 %v192, %v191
  %v194 = vld [vmem:[#allocation2] sm:$0xff]
  %v195 = vld [vmem:[#allocation2 + $0x8] sm:$0xff]
  %v196 = vld [vmem:[%s4] sm:$0xf]
  %v197 = vld [vmem:[%s4 + $0x4] sm:$0xf]
  %v198 = vld [vmem:[%s4 + $0x8] sm:$0xf]
  %v199 = vld [vmem:[%s4 + $0xc] sm:$0xf]
  %v200 = vld [vmem:[%s4 + $0x10] sm:$0xf]
  %v201 = vld [vmem:[%s4 + $0x14] sm:$0xf]
  %v202 = vld [vmem:[%s4 + $0x18] sm:$0xf]
  %v203 = vld [vmem:[%s4 + $0x1c] sm:$0xf]
  %v212 = vunpack.c.l.b16 %v196
  %v213 = vunpack.c.l.b16 %v197
  %v214 = vunpack.c.l.b16 %v198
  %v215 = vunpack.c.l.b16 %v199
  %v216 = vunpack.c.l.b16 %v200
  %v217 = vunpack.c.l.b16 %v201
  %v218 = vunpack.c.l.b16 %v202
  %v219 = vunpack.c.l.b16 %v203
  %v220 = vpack.c.b16 %v213, %v212
  %v221 = vpack.c.b16 %v215, %v214
  %v222 = vpack.c.b16 %v217, %v216
  %v223 = vpack.c.b16 %v219, %v218
  %vm228 = vcmask 523264
  %v230 = vsel %vm228, %v193, 0
  %232 = vmatprep.subr.bf16.mxu0 0
  %233 = vmatpush1.bf16.msra.mxu0 0
  %234 = vmatprep.subr.bf16.mxu0 0
  %235 = vmatpush1.bf16.msra.mxu0 0
  %236 = vmatprep.subr.bf16.mxu0 0
  %237 = vmatpush1.bf16.msra.mxu0 0
  %238 = vmatprep.subr.bf16.mxu0 0
  %239 = vmatpush1.bf16.msra.mxu0 0
  %240 = vmatprep.subr.bf16.mxu0 0
  %241 = vmatpush1.bf16.msra.mxu0 %v223
  %242 = vmatprep.subr.bf16.mxu0 0
  %243 = vmatpush1.bf16.msra.mxu0 %v222
  %244 = vmatprep.subr.bf16.mxu0 0
  %245 = vmatpush1.bf16.msra.mxu0 %v221
  %246 = vmatprep.subr.bf16.mxu0 0
  %247 = vmatpush1.bf16.msra.mxu0 %v220
  %248 = vmatprep.subr.bf16.mxu0 0
  %249 = vmatpush2.bf16.msra.mxu0 0
  %250 = vmatprep.subr.bf16.mxu0 0
  %251 = vmatpush2.bf16.msra.mxu0 0
  %252 = vmatprep.subr.bf16.mxu0 0
  %253 = vmatpush2.bf16.msra.mxu0 0
  %254 = vmatprep.subr.bf16.mxu0 0
  %255 = vmatpush2.bf16.msra.mxu0 0
  %256 = vmatprep.subr.bf16.mxu0 0
  %257 = vmatpush2.bf16.msra.mxu0 0
  %258 = vmatprep.subr.bf16.mxu0 0
  %259 = vmatpush2.bf16.msra.mxu0 0
  %260 = vmatprep.subr.bf16.mxu0 0
  %261 = vmatpush2.bf16.msra.mxu0 0
  %262 = vmatprep.subr.bf16.mxu0 0
  %263 = vmatpush2.bf16.msra.mxu0 0
  %264 = vmatprep.mubr.bf16.mxu0 0
  %265 = vmatmul.mubr.bf16.gmra.mxu0 %v230
  %v266 = vpop.f32.mrf.mxu0
  %v267 = vadd.f32 0.0, %v266
  %v268 = vpop.f32.mrf.mxu0
  %v269 = vpop.f32.mrf.mxu0
  %v270 = vadd.f32 0.0, %v269
  %v271 = vpop.f32.mrf.mxu0
  %272 = vdwg.mxu0
  %v273 = vadd.f32 %v194, %v267
  %v274 = vadd.f32 %v195, %v270
  %275 = vst.msk [vmem:[#allocation2] sm:$0xff] %vm34, %v273
  %276 = vst.msk [vmem:[#allocation2 + $0x8] sm:$0xff] %vm34, %v274
  // Predicated region
  $region26: #{transformer_forward.12} parent=0 // pred_check
    %p277 = pneg %p21
  $region27: #{transformer_forward.12} parent=0 // pred_check_branch
    %279 = sbr.rel (%p277) target = $region29
  $region28: #{transformer_forward.12} parent=0 // pred_region
    %v280 = vld [vmem:[#allocation2] sm:$0xff]
    %v281 = vld [vmem:[#allocation2 + $0x8] sm:$0xff]
    %v282 = vadd.f32 %v280, %v30
    %v283 = vadd.f32 %v281, %v31
    %v284 = vpack.c.bf16 %v283, %v282
    %v286 = vunpack.c.l.b16 %v284
    %v287 = vunpack.c.h.b16 %v284
    %v288 = vpack.c.b16 %v286, %v286
    %v289 = vpack.c.b16 %v287, %v287
    %vm292 = vcmask 257024
    %293 = vst.msk [vmem:[%s5] sm:$0xf] %vm292, %v288
    %294 = vst.msk [vmem:[%s5 + $0x4] sm:$0xf] %vm292, %v289
  $region29: #{transformer_forward.12} parent=0 // pred_fallthru
    _
  // Predicated region
  $region30: #{transformer_forward.12} parent=0 // pred_check
    _
  $region31: #{transformer_forward.12} parent=0 // pred_check_branch
    %296 = sbr.rel (0) target = $region33
  $region32: #{transformer_forward.12} parent=0 // pred_region
    _
  $region33: #{transformer_forward.12} parent=0 // pred_fallthru
    _
  // Predicated region
  $region34: #{transformer_forward.12} parent=0 // pred_check
    _
  $region35: #{transformer_forward.12} parent=0 // pred_check_branch
    %298 = sbr.rel (0) target = $region37
  $region36: #{transformer_forward.12} parent=0 // pred_region
    _
  $region37: #{transformer_forward.12} parent=0 // pred_fallthru
    _

// kernel: transformer_forward.10
$region0: #{transformer_forward.10}
  #allocation0 [shape = 'u32[]', space=smem, size = 0x4, offset = 0x4, fixed_abs, tag = 'smem constant byte address 0x4 - core index']
  #allocation1 [shape = 'u32[144,128]{1,0:T(1,128)}', space=vmem, size = 0x12000, scoped, tag = 'internal scratch']
  #allocation2 [shape = 'f32[8,4]{1,0:T(8,128)}', space=vmem, size = 0x1000, scoped, tag = 'scratch operand']
  #allocation3 [shape = 'f32[8,4]{1,0:T(8,128)}', space=vmem, size = 0x1000, scoped, tag = 'scratch operand']
  #allocation4 [shape = 'f32[8,32]{1,0:T(8,128)}', space=vmem, size = 0x1000, scoped, tag = 'scratch operand']
  %s0 = inlined_call_operand.vmem [shape: bf16[2,8,32], index: 0, kind: input, shape index: {}]
  %s1 = inlined_call_operand.vmem [shape: bf16[2,8,32], index: 1, kind: input, shape index: {}]
  %s2 = inlined_call_operand.vmem [shape: bf16[2,8,32], index: 2, kind: input, shape index: {}]
  %s3 = inlined_call_operand.vmem [shape: f32[2,1,8], index: 3, kind: input, shape index: {}]
  %s4 = inlined_call_operand.vmem [shape: bf16[2,8,32], index: 4, kind: output, shape index: {}]
  %s5 = sld [smem:[#allocation0]]
  $region61: #{transformer_forward.10} parent=0
    _
  %s7 = ssub.s32 1, %s5
  %s8 = scalar_select 0, %s7, %s5
  loop: start=0, step=1, limit=4
  $region2: #{transformer_forward.10} parent=0 // loop_pre_header
    _
  $region3: #{transformer_forward.10} parent=0 // loop_header
    %s10 = sphi 0, %s14
    %p11 = scmp.ge.s32.totalorder %s10, 4
    %s17 = sphi 0, %s36
    %s18 = sphi 0, %s32
    %s19 = sphi 0, %s28
    %s20 = sphi 0, %s17
    %s21 = sphi 0, %s18
    %s22 = sphi 0, %s19
    %s23 = sphi 0, %s20
    %s24 = sphi 0, %s21
    %s25 = sphi 0, %s22
    %s41 = sphi 0, %s43
    %s44 = sphi 0, %s41
    %s45 = sphi 0, %s44
    %s61 = sphi 0, %s45
    %s69 = sphi 0, %s71
    %s72 = sphi 0, %s69
    %s73 = sphi 0, %s72
    %s89 = sphi 0, %s73
    %s97 = sphi 0, %s99
    %s100 = sphi 0, %s97
    %s101 = sphi 0, %s100
    %s117 = sphi 0, %s101
    %s125 = sphi 0, %s127
    %s128 = sphi 0, %s125
    %s129 = sphi 0, %s128
    %s145 = sphi 0, %s129
    %s153 = sphi 0, %s155
    %s156 = sphi 0, %s153
    %s157 = sphi 0, %s156
    %s173 = sphi 0, %s157
  $region4: #{transformer_forward.10} parent=0 // loop_header_branch
    %13 = sbr.rel (%p11) target = $region8
  $region5: #{transformer_forward.10} parent=0 // loop_body
    %s15 = ssub.s32 %s10, 1
    %s16 = ssub.s32 %s10, 2
    %s26 = sadd.s32 1, %s19
    %p27 = scmp.ge.s32.totalorder %s26, 1
    %s28 = scalar_select %p27, 0, %s26
    %s29 = sadd.s32 1, %s18
    %s30 = scalar_select %p27, %s29, %s18
    %p31 = scmp.ge.s32.totalorder %s30, 1
    %s32 = scalar_select %p31, 0, %s30
    %s33 = sadd.s32 1, %s17
    %s34 = scalar_select %p31, %s33, %s17
    %p35 = scmp.ge.s32.totalorder %s34, 2
    %s36 = scalar_select %p35, 0, %s34
    %s37 = ssub.s32 %s17, %s36
    %s38 = ssub.s32 %s18, %s32
    %s39 = sor.u32 %s37, %s38
    %p40 = scmp.eq.s32.totalorder %s39, 0
    %s42 = sadd.s32 %s41, 1
    %s43 = scalar_select %p40, %s41, %s42
    %p46 = pneg %p40
    %p47 = scmp.eq.s32.totalorder %s10, 1
    %p48 = por %p46, %p47
    %p49 = scmp.ne.s32.totalorder %s41, %s44
    %p50 = scmp.eq.s32.totalorder %s10, 0
    %p51 = por %p49, %p50
    %p52 = scmp.ne.s32.totalorder %s41, %s44
    %p53 = scmp.eq.s32.totalorder %s15, 1
    %p54 = por %p52, %p53
    %p55 = scmp.ne.s32.totalorder %s44, %s45
    %p56 = scmp.eq.s32.totalorder %s15, 0
    %p57 = por %p55, %p56
    %p58 = scmp.ne.s32.totalorder %s44, %s45
    %p59 = scmp.eq.s32.totalorder %s16, 1
    %p60 = por %p58, %p59
    %p62 = scmp.ne.s32.totalorder %s45, %s61
    %p63 = scmp.eq.s32.totalorder %s16, 0
    %p64 = por %p62, %p63
    %s65 = ssub.s32 %s17, %s36
    %s66 = ssub.s32 %s19, %s28
    %s67 = sor.u32 %s65, %s66
    %p68 = scmp.eq.s32.totalorder %s67, 0
    %s70 = sadd.s32 %s69, 1
    %s71 = scalar_select %p68, %s69, %s70
    %p74 = pneg %p68
    %p75 = scmp.eq.s32.totalorder %s10, 1
    %p76 = por %p74, %p75
    %p77 = scmp.ne.s32.totalorder %s69, %s72
    %p78 = scmp.eq.s32.totalorder %s10, 0
    %p79 = por %p77, %p78
    %p80 = scmp.ne.s32.totalorder %s69, %s72
    %p81 = scmp.eq.s32.totalorder %s15, 1
    %p82 = por %p80, %p81
    %p83 = scmp.ne.s32.totalorder %s72, %s73
    %p84 = scmp.eq.s32.totalorder %s15, 0
    %p85 = por %p83, %p84
    %p86 = scmp.ne.s32.totalorder %s72, %s73
    %p87 = scmp.eq.s32.totalorder %s16, 1
    %p88 = por %p86, %p87
    %p90 = scmp.ne.s32.totalorder %s73, %s89
    %p91 = scmp.eq.s32.totalorder %s16, 0
    %p92 = por %p90, %p91
    %s93 = ssub.s32 %s17, %s36
    %s94 = ssub.s32 %s19, %s28
    %s95 = sor.u32 %s93, %s94
    %p96 = scmp.eq.s32.totalorder %s95, 0
    %s98 = sadd.s32 %s97, 1
    %s99 = scalar_select %p96, %s97, %s98
    %p102 = pneg %p96
    %p103 = scmp.eq.s32.totalorder %s10, 1
    %p104 = por %p102, %p103
    %p105 = scmp.ne.s32.totalorder %s97, %s100
    %p106 = scmp.eq.s32.totalorder %s10, 0
    %p107 = por %p105, %p106
    %p108 = scmp.ne.s32.totalorder %s97, %s100
    %p109 = scmp.eq.s32.totalorder %s15, 1
    %p110 = por %p108, %p109
    %p111 = scmp.ne.s32.totalorder %s100, %s101
    %p112 = scmp.eq.s32.totalorder %s15, 0
    %p113 = por %p111, %p112
    %p114 = scmp.ne.s32.totalorder %s100, %s101
    %p115 = scmp.eq.s32.totalorder %s16, 1
    %p116 = por %p114, %p115
    %p118 = scmp.ne.s32.totalorder %s101, %s117
    %p119 = scmp.eq.s32.totalorder %s16, 0
    %p120 = por %p118, %p119
    %s121 = ssub.s32 %s17, %s36
    %s122 = ssub.s32 %s19, %s28
    %s123 = sor.u32 %s121, %s122
    %p124 = scmp.eq.s32.totalorder %s123, 0
    %s126 = sadd.s32 %s125, 1
    %s127 = scalar_select %p124, %s125, %s126
    %p130 = pneg %p124
    %p131 = scmp.eq.s32.totalorder %s10, 1
    %p132 = por %p130, %p131
    %p133 = scmp.ne.s32.totalorder %s125, %s128
    %p134 = scmp.eq.s32.totalorder %s10, 0
    %p135 = por %p133, %p134
    %p136 = scmp.ne.s32.totalorder %s125, %s128
    %p137 = scmp.eq.s32.totalorder %s15, 1
    %p138 = por %p136, %p137
    %p139 = scmp.ne.s32.totalorder %s128, %s129
    %p140 = scmp.eq.s32.totalorder %s15, 0
    %p141 = por %p139, %p140
    %p142 = scmp.ne.s32.totalorder %s128, %s129
    %p143 = scmp.eq.s32.totalorder %s16, 1
    %p144 = por %p142, %p143
    %p146 = scmp.ne.s32.totalorder %s129, %s145
    %p147 = scmp.eq.s32.totalorder %s16, 0
    %p148 = por %p146, %p147
    %s149 = ssub.s32 %s17, %s36
    %s150 = ssub.s32 %s18, %s32
    %s151 = sor.u32 %s149, %s150
    %p152 = scmp.eq.s32.totalorder %s151, 0
    %s154 = sadd.s32 %s153, 1
    %s155 = scalar_select %p152, %s153, %s154
    %p158 = pneg %p152
    %p159 = scmp.eq.s32.totalorder %s10, 1
    %p160 = por %p158, %p159
    %p161 = scmp.ne.s32.totalorder %s153, %s156
    %p162 = scmp.eq.s32.totalorder %s10, 0
    %p163 = por %p161, %p162
    %p164 = scmp.ne.s32.totalorder %s153, %s156
    %p165 = scmp.eq.s32.totalorder %s15, 1
    %p166 = por %p164, %p165
    %p167 = scmp.ne.s32.totalorder %s156, %s157
    %p168 = scmp.eq.s32.totalorder %s15, 0
    %p169 = por %p167, %p168
    %p170 = scmp.ne.s32.totalorder %s156, %s157
    %p171 = scmp.eq.s32.totalorder %s16, 1
    %p172 = por %p170, %p171
    %p174 = scmp.ne.s32.totalorder %s157, %s173
    %p175 = scmp.eq.s32.totalorder %s16, 0
    %p176 = por %p174, %p175
    %p177 = scmp.le.s32.totalorder 1, %s10
    %p178 = scmp.lt.s32.totalorder %s10, 3
    %p179 = pnand %p177, %p178
    %p180 = pneg %p179
    // Predicated region
    $region9: #{transformer_forward.10} parent=5 // pred_check
      _
    $region10: #{transformer_forward.10} parent=5 // pred_check_branch
      %182 = sbr.rel (%p179) target = $region12
    $region11: #{transformer_forward.10} parent=5 // pred_region
      %s183 = ssub.s32 %s10, 1
    $region12: #{transformer_forward.10} parent=5 // pred_fallthru
      _
    %p184 = scmp.lt.s32.totalorder %s10, 2
    // Predicated region
    $region13: #{transformer_forward.10} parent=5 // pred_check
      %p185 = pneg %p184
    $region14: #{transformer_forward.10} parent=5 // pred_check_branch
      %187 = sbr.rel (%p185) target = $region16
    $region15: #{transformer_forward.10} parent=5 // pred_region
      // Predicated region
      $region17: #{transformer_forward.10} parent=15 // pred_check
        %p188 = pneg %p51
      $region18: #{transformer_forward.10} parent=15 // pred_check_branch
        %190 = sbr.rel (%p188) target = $region20
      $region19: #{transformer_forward.10} parent=15 // pred_region
        %p191 = scmp.lt.s32.totalorder %s17, 1
        %s192 = scalar_select %p191, %s17, 1
        %p193 = scmp.lt.s32.totalorder %s18, 0
        %s194 = scalar_select %p193, %s18, 0
        %s195 = sadd.s32 %s194, %s192
        %s196 = smul.addr %s195, 4
        %s197 = scalar_lea.vmem %s0, %s196
      $region20: #{transformer_forward.10} parent=15 // pred_fallthru
        _
      // Predicated region
      $region21: #{transformer_forward.10} parent=15 // pred_check
        %p198 = pneg %p79
      $region22: #{transformer_forward.10} parent=15 // pred_check_branch
        %200 = sbr.rel (%p198) target = $region24
      $region23: #{transformer_forward.10} parent=15 // pred_region
        %p201 = scmp.lt.s32.totalorder %s17, 1
        %s202 = scalar_select %p201, %s17, 1
        %p203 = scmp.lt.s32.totalorder %s19, 0
        %s204 = scalar_select %p203, %s19, 0
        %s205 = sadd.s32 %s204, %s202
        %s206 = smul.addr %s205, 4
        %s207 = scalar_lea.vmem %s1, %s206
      $region24: #{transformer_forward.10} parent=15 // pred_fallthru
        _
      // Predicated region
      $region25: #{transformer_forward.10} parent=15 // pred_check
        %p208 = pneg %p107
      $region26: #{transformer_forward.10} parent=15 // pred_check_branch
        %210 = sbr.rel (%p208) target = $region28
      $region27: #{transformer_forward.10} parent=15 // pred_region
        %p211 = scmp.lt.s32.totalorder %s17, 1
        %s212 = scalar_select %p211, %s17, 1
        %p213 = scmp.lt.s32.totalorder %s19, 0
        %s214 = scalar_select %p213, %s19, 0
        %s215 = sadd.s32 %s214, %s212
        %s216 = smul.addr %s215, 4
        %s217 = scalar_lea.vmem %s2, %s216
      $region28: #{transformer_forward.10} parent=15 // pred_fallthru
        _
      // Predicated region
      $region29: #{transformer_forward.10} parent=15 // pred_check
        %p218 = pneg %p135
      $region30: #{transformer_forward.10} parent=15 // pred_check_branch
        %220 = sbr.rel (%p218) target = $region32
      $region31: #{transformer_forward.10} parent=15 // pred_region
        %p221 = scmp.lt.s32.totalorder %s17, 1
        %s222 = scalar_select %p221, %s17, 1
        %p223 = scmp.lt.s32.totalorder %s19, 0
        %s224 = scalar_select %p223, %s19, 0
        %s225 = sadd.s32 %s224, %s222
        %s226 = scalar_lea.vmem %s3, %s225
      $region32: #{transformer_forward.10} parent=15 // pred_fallthru
        _
    $region16: #{transformer_forward.10} parent=5 // pred_fallthru
      _
    %p227 = scmp.le.s32.totalorder 1, %s10
    %p228 = scmp.lt.s32.totalorder %s10, 3
    %p229 = pnand %p227, %p228
    %p230 = pneg %p229
    // Predicated region
    $region33: #{transformer_forward.10} parent=5 // pred_check
      _
    $region34: #{transformer_forward.10} parent=5 // pred_check_branch
      %232 = sbr.rel (%p229) target = $region36
    $region35: #{transformer_forward.10} parent=5 // pred_region
      %s233 = ssub.s32 %s10, 1
      %p234 = scmp.lt.s32.totalorder %s20, 1
      %s235 = scalar_select %p234, %s20, 1
      %p236 = scmp.lt.s32.totalorder %s21, 0
      %s237 = scalar_select %p236, %s21, 0
      %s238 = sadd.s32 %s237, %s235
      %s239 = smul.addr %s238, 4
      %s240 = scalar_lea.vmem %s0, %s239
      %p241 = pneg %p57
      %p242 = pneg %p54
      %p243 = scmp.lt.s32.totalorder %s20, 1
      %s244 = scalar_select %p243, %s20, 1
      %p245 = scmp.lt.s32.totalorder %s22, 0
      %s246 = scalar_select %p245, %s22, 0
      %s247 = sadd.s32 %s246, %s244
      %s248 = smul.addr %s247, 4
      %s249 = scalar_lea.vmem %s1, %s248
      %p250 = pneg %p85
      %p251 = pneg %p82
      %p252 = scmp.lt.s32.totalorder %s20, 1
      %s253 = scalar_select %p252, %s20, 1
      %p254 = scmp.lt.s32.totalorder %s22, 0
      %s255 = scalar_select %p254, %s22, 0
      %s256 = sadd.s32 %s255, %s253
      %s257 = smul.addr %s256, 4
      %s258 = scalar_lea.vmem %s2, %s257
      %p259 = pneg %p113
      %p260 = pneg %p110
      %p261 = scmp.lt.s32.totalorder %s20, 1
      %s262 = scalar_select %p261, %s20, 1
      %p263 = scmp.lt.s32.totalorder %s22, 0
      %s264 = scalar_select %p263, %s22, 0
      %s265 = sadd.s32 %s264, %s262
      %s266 = scalar_lea.vmem %s3, %s265
      %p267 = pneg %p141
      %p268 = pneg %p138
      %p269 = pneg %p169
      %p270 = pneg %p166
      %p271 = scmp.lt.s32.totalorder %s20, 1
      %s272 = scalar_select %p271, %s20, 1
      %p273 = scmp.lt.s32.totalorder %s21, 0
      %s274 = scalar_select %p273, %s21, 0
      %s275 = sadd.s32 %s274, %s272
      %s276 = smul.addr %s275, 4
      %s277 = scalar_lea.vmem %s4, %s276
      %p278 = scmp.lt.s32.totalorder %s20, 1
      %s279 = scalar_select %p278, %s20, 1
      %p280 = scmp.lt.s32.totalorder %s21, 0
      %s281 = scalar_select %p280, %s21, 0
      %s282 = sadd.s32 %s281, %s279
      %s283 = smul.addr %s282, 4
      %s284 = scalar_lea.vmem %s0, %s283
      %p285 = scmp.lt.s32.totalorder %s20, 1
      %s286 = scalar_select %p285, %s20, 1
      %p287 = scmp.lt.s32.totalorder %s22, 0
      %s288 = scalar_select %p287, %s22, 0
      %s289 = sadd.s32 %s288, %s286
      %s290 = smul.addr %s289, 4
      %s291 = scalar_lea.vmem %s1, %s290
      %p292 = scmp.lt.s32.totalorder %s20, 1
      %s293 = scalar_select %p292, %s20, 1
      %p294 = scmp.lt.s32.totalorder %s22, 0
      %s295 = scalar_select %p294, %s22, 0
      %s296 = sadd.s32 %s295, %s293
      %s297 = smul.addr %s296, 4
      %s298 = scalar_lea.vmem %s2, %s297
      %p299 = scmp.lt.s32.totalorder %s20, 1
      %s300 = scalar_select %p299, %s20, 1
      %p301 = scmp.lt.s32.totalorder %s22, 0
      %s302 = scalar_select %p301, %s22, 0
      %s303 = sadd.s32 %s302, %s300
      %s304 = scalar_lea.vmem %s3, %s303
      %p305 = scmp.lt.s32.totalorder %s20, 1
      %s306 = scalar_select %p305, %s20, 1
      %p307 = scmp.lt.s32.totalorder %s21, 0
      %s308 = scalar_select %p307, %s21, 0
      %s309 = sadd.s32 %s308, %s306
      %s310 = smul.addr %s309, 4
      %s311 = scalar_lea.vmem %s4, %s310
      %s313 = smul.u32 %s21, 8
      %s314 = smul.u32 %s22, 8
      %p315 = scmp.eq.s32.totalorder %s22, 0
      // Predicated region
      $region37: #{transformer_forward.10} parent=35 // pred_check
        %p316 = pneg %p315
      $region38: #{transformer_forward.10} parent=35 // pred_check_branch
        %318 = sbr.rel (%p316) target = $region40
      $region39: #{transformer_forward.10} parent=35 // pred_region
        %vm319 = vcmask 31744
        %320 = vst.msk [vmem:[#allocation2] sm:$0xff] %vm319, -1e+30
        %321 = vst.msk [vmem:[#allocation3] sm:$0xff] %vm319, 0.0
        %vm322 = vcmask 261120
        %323 = vst.msk [vmem:[#allocation4] sm:$0xff] %vm322, 0.0
      $region40: #{transformer_forward.10} parent=35 // pred_fallthru
        _
      %s324 = sadd.s32 %s313, 7
      %p325 = scmp.le.s32.totalorder %s314, %s324
      // Predicated region
      $region41: #{transformer_forward.10} parent=35 // pred_check
        %p326 = pneg %p325
      $region42: #{transformer_forward.10} parent=35 // pred_check_branch
        %328 = sbr.rel (%p326) target = $region44
      $region43: #{transformer_forward.10} parent=35 // pred_region
        %v329 = vld [vmem:[%s304] sm:$0x1]
        %v330 = vlaneseq
        %v331 = vshrl.u32 %v330, 7
        %v332 = vstv %s313
        %v333 = vadd.s32 %v332, %v331
        %v334 = vlaneseq
        %v335 = vand.u32 %v334, 127
        %v336 = vstv %s314
        %v337 = vadd.s32 %v336, %v335
        %vm338 = vcmp.le.s32.totalorder %v337, %v333
        %v339 = vld [vmem:[%s284] sm:$0xf]
        %v340 = vld [vmem:[%s291] sm:$0xf]
        %v341 = vld [vmem:[%s298] sm:$0xf]
        %v343 = vlaneseq
        %v344 = vshrl.u32 %v343, 7
        %v345 = vsub.s32 0, %v344
        %v346 = vrot.slane %v329, %v345
        %vm348 = vcmask 64512
        %v350 = vsel %vm348, %v339, 0
        %v353 = vsel %vm348, %v340, 0
        %355 = vmatprep.subr.bf16.mxu0 0
        %356 = vmatpush1.bf16.xpose.msra.mxu0 0
        %357 = vmatprep.subr.bf16.mxu0 0
        %358 = vmatpush1.bf16.xpose.msra.mxu0 0
        %359 = vmatprep.subr.bf16.mxu0 0
        %360 = vmatpush1.bf16.xpose.msra.mxu0 0
        %361 = vmatprep.subr.bf16.mxu0 0
        %362 = vmatpush1.bf16.xpose.msra.mxu0 0
        %363 = vmatprep.subr.bf16.mxu0 0
        %364 = vmatpush1.bf16.xpose.msra.mxu0 0
        %365 = vmatprep.subr.bf16.mxu0 0
        %366 = vmatpush1.bf16.xpose.msra.mxu0 0
        %367 = vmatprep.subr.bf16.mxu0 0
        %368 = vmatpush1.bf16.xpose.msra.mxu0 0
        %369 = vmatprep.subr.bf16.mxu0 0
        %370 = vmatpush1.bf16.xpose.msra.mxu0 %v353
        %371 = vmatprep.subr.bf16.mxu0 0
        %372 = vmatpush2.bf16.xpose.msra.mxu0 0
        %373 = vmatprep.subr.bf16.mxu0 0
        %374 = vmatpush2.bf16.xpose.msra.mxu0 0
        %375 = vmatprep.subr.bf16.mxu0 0
        %376 = vmatpush2.bf16.xpose.msra.mxu0 0
        %377 = vmatprep.subr.bf16.mxu0 0
        %378 = vmatpush2.bf16.xpose.msra.mxu0 0
        %379 = vmatprep.subr.bf16.mxu0 0
        %380 = vmatpush2.bf16.xpose.msra.mxu0 0
        %381 = vmatprep.subr.bf16.mxu0 0
        %382 = vmatpush2.bf16.xpose.msra.mxu0 0
        %383 = vmatprep.subr.bf16.mxu0 0
        %384 = vmatpush2.bf16.xpose.msra.mxu0 0
        %385 = vmatprep.subr.bf16.mxu0 0
        %386 = vmatpush2.bf16.xpose.msra.mxu0 0
        %387 = vmatprep.mubr.bf16.mxu0 0
        %388 = vmatmul.mubr.bf16.gmra.mxu0 %v350
        %v389 = vpop.f32.mrf.mxu0
        %v390 = vadd.f32 %v346, %v389
        %v391 = vpop.f32.mrf.mxu0
        %v392 = vpop.f32.mrf.mxu0
        %v393 = vpop.f32.mrf.mxu0
        %394 = vdwg.mxu0
        %v395 = vsel %vm338, %v390, -1e+30
        %v396 = vld [vmem:[#allocation2] sm:$0xff]
        %v397 = vld [vmem:[#allocation3] sm:$0xff]
        %v398 = vsel %vm348, %v395, -inf
        %399 = vmax.xlane.f32.xlu0 %v398
        %v400 = vpop.xlane.xlu0 %399
        %v401 = vmax.f32 %v396, %v400
        %v402 = vsub.f32 %v396, %v401
        %v403 = vmul.f32 %v402, 1.442695
        %v404 = vpow.pop %v403
        %406 = vset.pattern.permute.xlu0 0
        %407 = vperm.xlu0 %406, %v401
        %v408 = vpop.permute.xlu0 %407
        %v410 = vsub.f32 %v395, %v408
        %v411 = vmul.f32 %v410, 1.442695
        %v412 = vpow.pop %v411
        %v413 = vmul.f32 %v404, %v397
        %v414 = vsel %vm348, %v412, 0.0
        %415 = vadd.xlane.f32.xlu0 %v414
        %v416 = vpop.xlane.xlu0 %415
        %v417 = vadd.f32 %v413, %v416
        %vm418 = vcmask 7168
        %419 = vst.msk [vmem:[#allocation3] sm:$0xff] %vm418, %v417
        %v420 = vld [vmem:[#allocation4] sm:$0xff]
        %422 = vset.pattern.permute.xlu0 0
        %423 = vperm.xlu0 %422, %v404
        %v424 = vpop.permute.xlu0 %423
        %v426 = vmul.f32 %v424, %v420
        %v427 = vpack.c.bf16 %v412, %v412
        %v429 = vsel %vm348, %v427, 0
        %vm431 = vcmask 1043456
        %v433 = vsel %vm431, %v341, 0
        %435 = vmatprep.subr.bf16.mxu0 0
        %436 = vmatpush1.bf16.msra.mxu0 0
        %437 = vmatprep.subr.bf16.mxu0 0
        %438 = vmatpush1.bf16.msra.mxu0 0
        %439 = vmatprep.subr.bf16.mxu0 0
        %440 = vmatpush1.bf16.msra.mxu0 0
        %441 = vmatprep.subr.bf16.mxu0 0
        %442 = vmatpush1.bf16.msra.mxu0 0
        %443 = vmatprep.subr.bf16.mxu0 0
        %444 = vmatpush1.bf16.msra.mxu0 0
        %445 = vmatprep.subr.bf16.mxu0 0
        %446 = vmatpush1.bf16.msra.mxu0 0
        %447 = vmatprep.subr.bf16.mxu0 0
        %448 = vmatpush1.bf16.msra.mxu0 0
        %449 = vmatprep.subr.bf16.mxu0 0
        %450 = vmatpush1.bf16.msra.mxu0 %v433
        %451 = vmatprep.subr.bf16.mxu0 0
        %452 = vmatpush2.bf16.msra.mxu0 0
        %453 = vmatprep.subr.bf16.mxu0 0
        %454 = vmatpush2.bf16.msra.mxu0 0
        %455 = vmatprep.subr.bf16.mxu0 0
        %456 = vmatpush2.bf16.msra.mxu0 0
        %457 = vmatprep.subr.bf16.mxu0 0
        %458 = vmatpush2.bf16.msra.mxu0 0
        %459 = vmatprep.subr.bf16.mxu0 0
        %460 = vmatpush2.bf16.msra.mxu0 0
        %461 = vmatprep.subr.bf16.mxu0 0
        %462 = vmatpush2.bf16.msra.mxu0 0
        %463 = vmatprep.subr.bf16.mxu0 0
        %464 = vmatpush2.bf16.msra.mxu0 0
        %465 = vmatprep.subr.bf16.mxu0 0
        %466 = vmatpush2.bf16.msra.mxu0 0
        %467 = vmatprep.mubr.bf16.mxu0 0
        %468 = vmatmul.mubr.bf16.gmra.mxu0 %v429
        %v469 = vpop.f32.mrf.mxu0
        %v470 = vadd.f32 0.0, %v469
        %v471 = vpop.f32.mrf.mxu0
        %v472 = vpop.f32.mrf.mxu0
        %v473 = vpop.f32.mrf.mxu0
        %474 = vdwg.mxu0
        %v475 = vadd.f32 %v426, %v470
        %476 = vst.msk [vmem:[#allocation4] sm:$0xff] %vm348, %v475
        %477 = vst.msk [vmem:[#allocation2] sm:$0xff] %vm418, %v401
        %v478 = vld [vmem:[%s284] sm:$0xf]
        %v479 = vld [vmem:[%s291] sm:$0xf]
        %v480 = vld [vmem:[%s298] sm:$0xf]
        %v482 = vunpack.c.l.b16 %v478
        %v483 = vpack.c.b16 %v482, %v482
        %484 = vrot.lane.b32.xlu0 %v483, 120
        %v485 = vpop.permute.xlu0 %484
        %v487 = vunpack.c.l.b16 %v479
        %v488 = vpack.c.b16 %v487, %v487
        %489 = vrot.lane.b32.xlu0 %v488, 120
        %v490 = vpop.permute.xlu0 %489
        %v492 = vsel %vm348, %v485, 0
        %v495 = vsel %vm348, %v490, 0
        %497 = vmatprep.subr.bf16.mxu0 0
        %498 = vmatpush1.bf16.xpose.msra.mxu0 0
        %499 = vmatprep.subr.bf16.mxu0 0
        %500 = vmatpush1.bf16.xpose.msra.mxu0 0
        %501 = vmatprep.subr.bf16.mxu0 0
        %502 = vmatpush1.bf16.xpose.msra.mxu0 0
        %503 = vmatprep.subr.bf16.mxu0 0
        %504 = vmatpush1.bf16.xpose.msra.mxu0 0
        %505 = vmatprep.subr.bf16.mxu0 0
        %506 = vmatpush1.bf16.xpose.msra.mxu0 0
        %507 = vmatprep.subr.bf16.mxu0 0
        %508 = vmatpush1.bf16.xpose.msra.mxu0 0
        %509 = vmatprep.subr.bf16.mxu0 0
        %510 = vmatpush1.bf16.xpose.msra.mxu0 0
        %511 = vmatprep.subr.bf16.mxu0 0
        %512 = vmatpush1.bf16.xpose.msra.mxu0 %v495
        %513 = vmatprep.subr.bf16.mxu0 0
        %514 = vmatpush2.bf16.xpose.msra.mxu0 0
        %515 = vmatprep.subr.bf16.mxu0 0
        %516 = vmatpush2.bf16.xpose.msra.mxu0 0
        %517 = vmatprep.subr.bf16.mxu0 0
        %518 = vmatpush2.bf16.xpose.msra.mxu0 0
        %519 = vmatprep.subr.bf16.mxu0 0
        %520 = vmatpush2.bf16.xpose.msra.mxu0 0
        %521 = vmatprep.subr.bf16.mxu0 0
        %522 = vmatpush2.bf16.xpose.msra.mxu0 0
        %523 = vmatprep.subr.bf16.mxu0 0
        %524 = vmatpush2.bf16.xpose.msra.mxu0 0
        %525 = vmatprep.subr.bf16.mxu0 0
        %526 = vmatpush2.bf16.xpose.msra.mxu0 0
        %527 = vmatprep.subr.bf16.mxu0 0
        %528 = vmatpush2.bf16.xpose.msra.mxu0 0
        %529 = vmatprep.mubr.bf16.mxu0 0
        %530 = vmatmul.mubr.bf16.gmra.mxu0 %v492
        %v531 = vpop.f32.mrf.mxu0
        %v532 = vadd.f32 %v346, %v531
        %v533 = vpop.f32.mrf.mxu0
        %v534 = vpop.f32.mrf.mxu0
        %v535 = vpop.f32.mrf.mxu0
        %536 = vdwg.mxu0
        %v537 = vsel %vm338, %v532, -1e+30
        %v538 = vld [vmem:[#allocation2] sm:$0xff]
        %v539 = vld [vmem:[#allocation3] sm:$0xff]
        %v540 = vsel %vm348, %v537, -inf
        %541 = vmax.xlane.f32.xlu0 %v540
        %v542 = vpop.xlane.xlu0 %541
        %v543 = vmax.f32 %v538, %v542
        %v544 = vsub.f32 %v538, %v543
        %v545 = vmul.f32 %v544, 1.442695
        %v546 = vpow.pop %v545
        %548 = vset.pattern.permute.xlu0 1
        %549 = vperm.xlu0 %548, %v543
        %v550 = vpop.permute.xlu0 %549
        %v552 = vsub.f32 %v537, %v550
        %v553 = vmul.f32 %v552, 1.442695
        %v554 = vpow.pop %v553
        %v555 = vmul.f32 %v546, %v539
        %v556 = vsel %vm348, %v554, 0.0
        %557 = vadd.xlane.f32.xlu0 %v556
        %v558 = vpop.xlane.xlu0 %557
        %v559 = vadd.f32 %v555, %v558
        %vm560 = vcmask 15368
        %561 = vst.msk [vmem:[#allocation3] sm:$0xff] %vm560, %v559
        %v562 = vld [vmem:[#allocation4] sm:$0xff]
        %564 = vset.pattern.permute.xlu0 1
        %565 = vperm.xlu0 %564, %v546
        %v566 = vpop.permute.xlu0 %565
        %v568 = vmul.f32 %v566, %v562
        %v569 = vpack.c.bf16 %v554, %v554
        %v571 = vunpack.c.l.b16 %v480
        %v572 = vpack.c.b16 %v571, %v571
        %573 = vrot.lane.b32.xlu0 %v572, 120
        %v574 = vpop.permute.xlu0 %573
        %v576 = vsel %vm348, %v569, 0
        %v579 = vsel %vm431, %v574, 0
        %581 = vmatprep.subr.bf16.mxu0 0
        %582 = vmatpush1.bf16.msra.mxu0 0
        %583 = vmatprep.subr.bf16.mxu0 0
        %584 = vmatpush1.bf16.msra.mxu0 0
        %585 = vmatprep.subr.bf16.mxu0 0
        %586 = vmatpush1.bf16.msra.mxu0 0
        %587 = vmatprep.subr.bf16.mxu0 0
        %588 = vmatpush1.bf16.msra.mxu0 0
        %589 = vmatprep.subr.bf16.mxu0 0
        %590 = vmatpush1.bf16.msra.mxu0 0
        %591 = vmatprep.subr.bf16.mxu0 0
        %592 = vmatpush1.bf16.msra.mxu0 0
        %593 = vmatprep.subr.bf16.mxu0 0
        %594 = vmatpush1.bf16.msra.mxu0 0
        %595 = vmatprep.subr.bf16.mxu0 0
        %596 = vmatpush1.bf16.msra.mxu0 %v579
        %597 = vmatprep.subr.bf16.mxu0 0
        %598 = vmatpush2.bf16.msra.mxu0 0
        %599 = vmatprep.subr.bf16.mxu0 0
        %600 = vmatpush2.bf16.msra.mxu0 0
        %601 = vmatprep.subr.bf16.mxu0 0
        %602 = vmatpush2.bf16.msra.mxu0 0
        %603 = vmatprep.subr.bf16.mxu0 0
        %604 = vmatpush2.bf16.msra.mxu0 0
        %605 = vmatprep.subr.bf16.mxu0 0
        %606 = vmatpush2.bf16.msra.mxu0 0
        %607 = vmatprep.subr.bf16.mxu0 0
        %608 = vmatpush2.bf16.msra.mxu0 0
        %609 = vmatprep.subr.bf16.mxu0 0
        %610 = vmatpush2.bf16.msra.mxu0 0
        %611 = vmatprep.subr.bf16.mxu0 0
        %612 = vmatpush2.bf16.msra.mxu0 0
        %613 = vmatprep.mubr.bf16.mxu0 0
        %614 = vmatmul.mubr.bf16.gmra.mxu0 %v576
        %v615 = vpop.f32.mrf.mxu0
        %v616 = vadd.f32 0.0, %v615
        %v617 = vpop.f32.mrf.mxu0
        %v618 = vpop.f32.mrf.mxu0
        %v619 = vpop.f32.mrf.mxu0
        %620 = vdwg.mxu0
        %622 = vrot.lane.b32.xlu0 %v616, 8
        %v623 = vpop.permute.xlu0 %622
        %v625 = vadd.f32 %v568, %v623
        %vm626 = vcmask 130112
        %627 = vst.msk [vmem:[#allocation4] sm:$0xff] %vm626, %v625
        %628 = vst.msk [vmem:[#allocation2] sm:$0xff] %vm560, %v543
        %v629 = vld [vmem:[%s284] sm:$0xf]
        %v630 = vld [vmem:[%s291] sm:$0xf]
        %v631 = vld [vmem:[%s298] sm:$0xf]
        %v633 = vunpack.c.l.b16 %v629
        %v634 = vpack.c.b16 %v633, %v633
        %635 = vrot.lane.b32.xlu0 %v634, 112
        %v636 = vpop.permute.xlu0 %635
        %v638 = vunpack.c.l.b16 %v630
        %v639 = vpack.c.b16 %v638, %v638
        %640 = vrot.lane.b32.xlu0 %v639, 112
        %v641 = vpop.permute.xlu0 %640
        %v643 = vsel %vm348, %v636, 0
        %v646 = vsel %vm348, %v641, 0
        %648 = vmatprep.subr.bf16.mxu0 0
        %649 = vmatpush1.bf16.xpose.msra.mxu0 0
        %650 = vmatprep.subr.bf16.mxu0 0
        %651 = vmatpush1.bf16.xpose.msra.mxu0 0
        %652 = vmatprep.subr.bf16.mxu0 0
        %653 = vmatpush1.bf16.xpose.msra.mxu0 0
        %654 = vmatprep.subr.bf16.mxu0 0
        %655 = vmatpush1.bf16.xpose.msra.mxu0 0
        %656 = vmatprep.subr.bf16.mxu0 0
        %657 = vmatpush1.bf16.xpose.msra.mxu0 0
        %658 = vmatprep.subr.bf16.mxu0 0
        %659 = vmatpush1.bf16.xpose.msra.mxu0 0
        %660 = vmatprep.subr.bf16.mxu0 0
        %661 = vmatpush1.bf16.xpose.msra.mxu0 0
        %662 = vmatprep.subr.bf16.mxu0 0
        %663 = vmatpush1.bf16.xpose.msra.mxu0 %v646
        %664 = vmatprep.subr.bf16.mxu0 0
        %665 = vmatpush2.bf16.xpose.msra.mxu0 0
        %666 = vmatprep.subr.bf16.mxu0 0
        %667 = vmatpush2.bf16.xpose.msra.mxu0 0
        %668 = vmatprep.subr.bf16.mxu0 0
        %669 = vmatpush2.bf16.xpose.msra.mxu0 0
        %670 = vmatprep.subr.bf16.mxu0 0
        %671 = vmatpush2.bf16.xpose.msra.mxu0 0
        %672 = vmatprep.subr.bf16.mxu0 0
        %673 = vmatpush2.bf16.xpose.msra.mxu0 0
        %674 = vmatprep.subr.bf16.mxu0 0
        %675 = vmatpush2.bf16.xpose.msra.mxu0 0
        %676 = vmatprep.subr.bf16.mxu0 0
        %677 = vmatpush2.bf16.xpose.msra.mxu0 0
        %678 = vmatprep.subr.bf16.mxu0 0
        %679 = vmatpush2.bf16.xpose.msra.mxu0 0
        %680 = vmatprep.mubr.bf16.mxu0 0
        %681 = vmatmul.mubr.bf16.gmra.mxu0 %v643
        %v682 = vpop.f32.mrf.mxu0
        %v683 = vadd.f32 %v346, %v682
        %v684 = vpop.f32.mrf.mxu0
        %v685 = vpop.f32.mrf.mxu0
        %v686 = vpop.f32.mrf.mxu0
        %687 = vdwg.mxu0
        %v688 = vsel %vm338, %v683, -1e+30
        %v689 = vld [vmem:[#allocation2] sm:$0xff]
        %v690 = vld [vmem:[#allocation3] sm:$0xff]
        %v691 = vsel %vm348, %v688, -inf
        %692 = vmax.xlane.f32.xlu0 %v691
        %v693 = vpop.xlane.xlu0 %692
        %v694 = vmax.f32 %v689, %v693
        %v695 = vsub.f32 %v689, %v694
        %v696 = vmul.f32 %v695, 1.442695
        %v697 = vpow.pop %v696
        %699 = vset.pattern.permute.xlu0 2
        %700 = vperm.xlu0 %699, %v694
        %v701 = vpop.permute.xlu0 %700
        %v703 = vsub.f32 %v688, %v701
        %v704 = vmul.f32 %v703, 1.442695
        %v705 = vpow.pop %v704
        %v706 = vmul.f32 %v697, %v690
        %v707 = vsel %vm348, %v705, 0.0
        %708 = vadd.xlane.f32.xlu0 %v707
        %v709 = vpop.xlane.xlu0 %708
        %v710 = vadd.f32 %v706, %v709
        %vm711 = vcmask 23568
        %712 = vst.msk [vmem:[#allocation3] sm:$0xff] %vm711, %v710
        %v713 = vld [vmem:[#allocation4] sm:$0xff]
        %715 = vset.pattern.permute.xlu0 2
        %716 = vperm.xlu0 %715, %v697
        %v717 = vpop.permute.xlu0 %716
        %v719 = vmul.f32 %v717, %v713
        %v720 = vpack.c.bf16 %v705, %v705
        %v722 = vunpack.c.l.b16 %v631
        %v723 = vpack.c.b16 %v722, %v722
        %724 = vrot.lane.b32.xlu0 %v723, 112
        %v725 = vpop.permute.xlu0 %724
        %v727 = vsel %vm348, %v720, 0
        %v730 = vsel %vm431, %v725, 0
        %732 = vmatprep.subr.bf16.mxu0 0
        %733 = vmatpush1.bf16.msra.mxu0 0
        %734 = vmatprep.subr.bf16.mxu0 0
        %735 = vmatpush1.bf16.msra.mxu0 0
        %736 = vmatprep.subr.bf16.mxu0 0
        %737 = vmatpush1.bf16.msra.mxu0 0
        %738 = vmatprep.subr.bf16.mxu0 0
        %739 = vmatpush1.bf16.msra.mxu0 0
        %740 = vmatprep.subr.bf16.mxu0 0
        %741 = vmatpush1.bf16.msra.mxu0 0
        %742 = vmatprep.subr.bf16.mxu0 0
        %743 = vmatpush1.bf16.msra.mxu0 0
        %744 = vmatprep.subr.bf16.mxu0 0
        %745 = vmatpush1.bf16.msra.mxu0 0
        %746 = vmatprep.subr.bf16.mxu0 0
        %747 = vmatpush1.bf16.msra.mxu0 %v730
        %748 = vmatprep.subr.bf16.mxu0 0
        %749 = vmatpush2.bf16.msra.mxu0 0
        %750 = vmatprep.subr.bf16.mxu0 0
        %751 = vmatpush2.bf16.msra.mxu0 0
        %752 = vmatprep.subr.bf16.mxu0 0
        %753 = vmatpush2.bf16.msra.mxu0 0
        %754 = vmatprep.subr.bf16.mxu0 0
        %755 = vmatpush2.bf16.msra.mxu0 0
        %756 = vmatprep.subr.bf16.mxu0 0
        %757 = vmatpush2.bf16.msra.mxu0 0
        %758 = vmatprep.subr.bf16.mxu0 0
        %759 = vmatpush2.bf16.msra.mxu0 0
        %760 = vmatprep.subr.bf16.mxu0 0
        %761 = vmatpush2.bf16.msra.mxu0 0
        %762 = vmatprep.subr.bf16.mxu0 0
        %763 = vmatpush2.bf16.msra.mxu0 0
        %764 = vmatprep.mubr.bf16.mxu0 0
        %765 = vmatmul.mubr.bf16.gmra.mxu0 %v727
        %v766 = vpop.f32.mrf.mxu0
        %v767 = vadd.f32 0.0, %v766
        %v768 = vpop.f32.mrf.mxu0
        %v769 = vpop.f32.mrf.mxu0
        %v770 = vpop.f32.mrf.mxu0
        %771 = vdwg.mxu0
        %773 = vrot.lane.b32.xlu0 %v767, 16
        %v774 = vpop.permute.xlu0 %773
        %v776 = vadd.f32 %v719, %v774
        %vm777 = vcmask 195712
        %778 = vst.msk [vmem:[#allocation4] sm:$0xff] %vm777, %v776
        %779 = vst.msk [vmem:[#allocation2] sm:$0xff] %vm711, %v694
        %v780 = vld [vmem:[%s284] sm:$0xf]
        %v781 = vld [vmem:[%s291] sm:$0xf]
        %v782 = vld [vmem:[%s298] sm:$0xf]
        %v784 = vunpack.c.l.b16 %v780
        %v785 = vpack.c.b16 %v784, %v784
        %786 = vrot.lane.b32.xlu0 %v785, 104
        %v787 = vpop.permute.xlu0 %786
        %v789 = vunpack.c.l.b16 %v781
        %v790 = vpack.c.b16 %v789, %v789
        %791 = vrot.lane.b32.xlu0 %v790, 104
        %v792 = vpop.permute.xlu0 %791
        %v794 = vsel %vm348, %v787, 0
        %v797 = vsel %vm348, %v792, 0
        %799 = vmatprep.subr.bf16.mxu0 0
        %800 = vmatpush1.bf16.xpose.msra.mxu0 0
        %801 = vmatprep.subr.bf16.mxu0 0
        %802 = vmatpush1.bf16.xpose.msra.mxu0 0
        %803 = vmatprep.subr.bf16.mxu0 0
        %804 = vmatpush1.bf16.xpose.msra.mxu0 0
        %805 = vmatprep.subr.bf16.mxu0 0
        %806 = vmatpush1.bf16.xpose.msra.mxu0 0
        %807 = vmatprep.subr.bf16.mxu0 0
        %808 = vmatpush1.bf16.xpose.msra.mxu0 0
        %809 = vmatprep.subr.bf16.mxu0 0
        %810 = vmatpush1.bf16.xpose.msra.mxu0 0
        %811 = vmatprep.subr.bf16.mxu0 0
        %812 = vmatpush1.bf16.xpose.msra.mxu0 0
        %813 = vmatprep.subr.bf16.mxu0 0
        %814 = vmatpush1.bf16.xpose.msra.mxu0 %v797
        %815 = vmatprep.subr.bf16.mxu0 0
        %816 = vmatpush2.bf16.xpose.msra.mxu0 0
        %817 = vmatprep.subr.bf16.mxu0 0
        %818 = vmatpush2.bf16.xpose.msra.mxu0 0
        %819 = vmatprep.subr.bf16.mxu0 0
        %820 = vmatpush2.bf16.xpose.msra.mxu0 0
        %821 = vmatprep.subr.bf16.mxu0 0
        %822 = vmatpush2.bf16.xpose.msra.mxu0 0
        %823 = vmatprep.subr.bf16.mxu0 0
        %824 = vmatpush2.bf16.xpose.msra.mxu0 0
        %825 = vmatprep.subr.bf16.mxu0 0
        %826 = vmatpush2.bf16.xpose.msra.mxu0 0
        %827 = vmatprep.subr.bf16.mxu0 0
        %828 = vmatpush2.bf16.xpose.msra.mxu0 0
        %829 = vmatprep.subr.bf16.mxu0 0
        %830 = vmatpush2.bf16.xpose.msra.mxu0 0
        %831 = vmatprep.mubr.bf16.mxu0 0
        %832 = vmatmul.mubr.bf16.gmra.mxu0 %v794
        %v833 = vpop.f32.mrf.mxu0
        %v834 = vadd.f32 %v346, %v833
        %v835 = vpop.f32.mrf.mxu0
        %v836 = vpop.f32.mrf.mxu0
        %v837 = vpop.f32.mrf.mxu0
        %838 = vdwg.mxu0
        %v839 = vsel %vm338, %v834, -1e+30
        %v840 = vld [vmem:[#allocation2] sm:$0xff]
        %v841 = vld [vmem:[#allocation3] sm:$0xff]
        %v842 = vsel %vm348, %v839, -inf
        %843 = vmax.xlane.f32.xlu0 %v842
        %v844 = vpop.xlane.xlu0 %843
        %v845 = vmax.f32 %v840, %v844
        %v846 = vsub.f32 %v840, %v845
        %v847 = vmul.f32 %v846, 1.442695
        %v848 = vpow.pop %v847
        %850 = vset.pattern.permute.xlu0 3
        %851 = vperm.xlu0 %850, %v845
        %v852 = vpop.permute.xlu0 %851
        %v854 = vsub.f32 %v839, %v852
        %v855 = vmul.f32 %v854, 1.442695
        %v856 = vpow.pop %v855
        %v857 = vmul.f32 %v848, %v841
        %v858 = vsel %vm348, %v856, 0.0
        %859 = vadd.xlane.f32.xlu0 %v858
        %v860 = vpop.xlane.xlu0 %859
        %v861 = vadd.f32 %v857, %v860
        %vm862 = vcmask 31768
        %863 = vst.msk [vmem:[#allocation3] sm:$0xff] %vm862, %v861
        %v864 = vld [vmem:[#allocation4] sm:$0xff]
        %866 = vset.pattern.permute.xlu0 3
        %867 = vperm.xlu0 %866, %v848
        %v868 = vpop.permute.xlu0 %867
        %v870 = vmul.f32 %v868, %v864
        %v871 = vpack.c.bf16 %v856, %v856
        %v873 = vunpack.c.l.b16 %v782
        %v874 = vpack.c.b16 %v873, %v873
        %875 = vrot.lane.b32.xlu0 %v874, 104
        %v876 = vpop.permute.xlu0 %875
        %v878 = vsel %vm348, %v871, 0
        %v881 = vsel %vm431, %v876, 0
        %883 = vmatprep.subr.bf16.mxu0 0
        %884 = vmatpush1.bf16.msra.mxu0 0
        %885 = vmatprep.subr.bf16.mxu0 0
        %886 = vmatpush1.bf16.msra.mxu0 0
        %887 = vmatprep.subr.bf16.mxu0 0
        %888 = vmatpush1.bf16.msra.mxu0 0
        %889 = vmatprep.subr.bf16.mxu0 0
        %890 = vmatpush1.bf16.msra.mxu0 0
        %891 = vmatprep.subr.bf16.mxu0 0
        %892 = vmatpush1.bf16.msra.mxu0 0
        %893 = vmatprep.subr.bf16.mxu0 0
        %894 = vmatpush1.bf16.msra.mxu0 0
        %895 = vmatprep.subr.bf16.mxu0 0
        %896 = vmatpush1.bf16.msra.mxu0 0
        %897 = vmatprep.subr.bf16.mxu0 0
        %898 = vmatpush1.bf16.msra.mxu0 %v881
        %899 = vmatprep.subr.bf16.mxu0 0
        %900 = vmatpush2.bf16.msra.mxu0 0
        %901 = vmatprep.subr.bf16.mxu0 0
        %902 = vmatpush2.bf16.msra.mxu0 0
        %903 = vmatprep.subr.bf16.mxu0 0
        %904 = vmatpush2.bf16.msra.mxu0 0
        %905 = vmatprep.subr.bf16.mxu0 0
        %906 = vmatpush2.bf16.msra.mxu0 0
        %907 = vmatprep.subr.bf16.mxu0 0
        %908 = vmatpush2.bf16.msra.mxu0 0
        %909 = vmatprep.subr.bf16.mxu0 0
        %910 = vmatpush2.bf16.msra.mxu0 0
        %911 = vmatprep.subr.bf16.mxu0 0
        %912 = vmatpush2.bf16.msra.mxu0 0
        %913 = vmatprep.subr.bf16.mxu0 0
        %914 = vmatpush2.bf16.msra.mxu0 0
        %915 = vmatprep.mubr.bf16.mxu0 0
        %916 = vmatmul.mubr.bf16.gmra.mxu0 %v878
        %v917 = vpop.f32.mrf.mxu0
        %v918 = vadd.f32 0.0, %v917
        %v919 = vpop.f32.mrf.mxu0
        %v920 = vpop.f32.mrf.mxu0
        %v921 = vpop.f32.mrf.mxu0
        %922 = vdwg.mxu0
        %924 = vrot.lane.b32.xlu0 %v918, 24
        %v925 = vpop.permute.xlu0 %924
        %v927 = vadd.f32 %v870, %v925
        %vm928 = vcmask 261312
        %929 = vst.msk [vmem:[#allocation4] sm:$0xff] %vm928, %v927
        %930 = vst.msk [vmem:[#allocation2] sm:$0xff] %vm862, %v845
      $region44: #{transformer_forward.10} parent=35 // pred_fallthru
        _
      // Predicated region
      $region45: #{transformer_forward.10} parent=35 // pred_check
        %p931 = pneg %p315
      $region46: #{transformer_forward.10} parent=35 // pred_check_branch
        %933 = sbr.rel (%p931) target = $region48
      $region47: #{transformer_forward.10} parent=35 // pred_region
        %v934 = vld [vmem:[#allocation3] sm:$0xff]
        %v935 = vmax.f32 %v934, 1e-30
        %v936 = vrcp.pop %v935
        %v937 = vld [vmem:[#allocation4] sm:$0xff]
        %939 = vset.pattern.permute.xlu0 0
        %940 = vperm.xlu0 %939, %v936
        %v941 = vpop.permute.xlu0 %940
        %v943 = vmul.f32 %v937, %v941
        %944 = vset.pattern.permute.xlu0 1
        %945 = vperm.xlu0 %944, %v936
        %v946 = vpop.permute.xlu0 %945
        %v948 = vmul.f32 %v937, %v946
        %949 = vset.pattern.permute.xlu0 2
        %950 = vperm.xlu0 %949, %v936
        %v951 = vpop.permute.xlu0 %950
        %v953 = vmul.f32 %v937, %v951
        %954 = vset.pattern.permute.xlu0 3
        %955 = vperm.xlu0 %954, %v936
        %v956 = vpop.permute.xlu0 %955
        %v958 = vmul.f32 %v937, %v956
        %vm959 = vcmask 64512
        %v960 = vsel %vm959, %v943, %v948
        %vm961 = vcmask 130048
        %v962 = vsel %vm961, %v960, %v953
        %vm963 = vcmask 195584
        %v964 = vsel %vm963, %v962, %v958
        %v965 = vpack.c.bf16 %v964, %v964
        %vm966 = vcmask 257024
        %967 = vst.msk [vmem:[%s311] sm:$0xf] %vm966, %v965
      $region48: #{transformer_forward.10} parent=35 // pred_fallthru
        _
      %p968 = scmp.lt.s32.totalorder %s20, 1
      %s969 = scalar_select %p968, %s20, 1
      %p970 = scmp.lt.s32.totalorder %s21, 0
      %s971 = scalar_select %p970, %s21, 0
      %s972 = sadd.s32 %s971, %s969
      %s973 = smul.addr %s972, 4
      %s974 = scalar_lea.vmem %s4, %s973
      // Predicated region
      $region49: #{transformer_forward.10} parent=35 // pred_check
        %p975 = pneg %p166
      $region50: #{transformer_forward.10} parent=35 // pred_check_branch
        %977 = sbr.rel (%p975) target = $region52
      $region51: #{transformer_forward.10} parent=35 // pred_region
        _
      $region52: #{transformer_forward.10} parent=35 // pred_fallthru
        _
    $region36: #{transformer_forward.10} parent=5 // pred_fallthru
      _
    %p978 = scmp.le.s32.totalorder 2, %s10
    // Predicated region
    $region53: #{transformer_forward.10} parent=5 // pred_check
      %p979 = pneg %p978
    $region54: #{transformer_forward.10} parent=5 // pred_check_branch
      %981 = sbr.rel (%p979) target = $region56
    $region55: #{transformer_forward.10} parent=5 // pred_region
      %s982 = ssub.s32 %s10, 2
      // Predicated region
      $region57: #{transformer_forward.10} parent=55 // pred_check
        %p983 = pneg %p172
      $region58: #{transformer_forward.10} parent=55 // pred_check_branch
        %985 = sbr.rel (%p983) target = $region60
      $region59: #{transformer_forward.10} parent=55 // pred_region
        %p986 = scmp.lt.s32.totalorder %s23, 1
        %s987 = scalar_select %p986, %s23, 1
        %p988 = scmp.lt.s32.totalorder %s24, 0
        %s989 = scalar_select %p988, %s24, 0
        %s990 = sadd.s32 %s989, %s987
        %s991 = smul.addr %s990, 4
        %s992 = scalar_lea.vmem %s4, %s991
      $region60: #{transformer_forward.10} parent=55 // pred_fallthru
        _
    $region56: #{transformer_forward.10} parent=5 // pred_fallthru
      _
  $region6: #{transformer_forward.10} parent=0 // loop_footer
    %s14 = sadd.s32 1, %s10
  $region7: #{transformer_forward.10} parent=0 // loop_footer_branch
    %9 = sbr.rel target = $region3
  $region8: #{transformer_forward.10} parent=0 // loop_exit
    _

// kernel: transformer_forward.17
$region0: #{transformer_forward.17}
  #allocation0 [shape = 'u32[]', space=smem, size = 0x4, offset = 0x4, fixed_abs, tag = 'smem constant byte address 0x4 - core index']
  #allocation1 [shape = 'u32[144,128]{1,0:T(1,128)}', space=vmem, size = 0x12000, scoped, tag = 'internal scratch']
  %s0 = inlined_call_operand.vmem [shape: bf16[16,32], index: 0, kind: input, shape index: {}]
  %s1 = inlined_call_operand.vmem [shape: f32[1,32], index: 1, kind: input, shape index: {}]
  %s2 = inlined_call_operand.vmem [shape: bf16[32,64], index: 2, kind: input, shape index: {}]
  %s3 = inlined_call_operand.hbm [shape: f32[16,64], index: 3, kind: output, shape index: {}]
  %s4 = sld [smem:[#allocation0]]
  $region22: #{transformer_forward.17} parent=0
    _
  %s6 = ssub.s32 1, %s4
  %s7 = scalar_select 0, %s6, %s4
  $region1: #{transformer_forward.17} parent=0
    #allocation2 [shape = 'u8[8192]{0}', space=vmem, size = 0x2000, scoped, tag = 'output window, operand 0, single buffered']
    #allocation3 [shape = 's32[1]{0}', space=sflag, size = 0x4, scoped, tag = 'scoped memory for transformer_forward.17']
    %8 = vsyncpa [#allocation3], 0
    // Predicated region
    $region2: #{transformer_forward.17} parent=1 // pred_check
      _
    $region3: #{transformer_forward.17} parent=1 // pred_check_branch
      %10 = sbr.rel (0) target = $region5
    $region4: #{transformer_forward.17} parent=1 // pred_region
      _
    $region5: #{transformer_forward.17} parent=1 // pred_fallthru
      _
    // Predicated region
    $region6: #{transformer_forward.17} parent=1 // pred_check
      _
    $region7: #{transformer_forward.17} parent=1 // pred_check_branch
      %12 = sbr.rel (0) target = $region9
    $region8: #{transformer_forward.17} parent=1 // pred_region
      _
    $region9: #{transformer_forward.17} parent=1 // pred_fallthru
      _
    // Predicated region
    $region10: #{transformer_forward.17} parent=1 // pred_check
      _
    $region11: #{transformer_forward.17} parent=1 // pred_check_branch
      %14 = sbr.rel (0) target = $region13
    $region12: #{transformer_forward.17} parent=1 // pred_region
      _
    $region13: #{transformer_forward.17} parent=1 // pred_fallthru
      _
    %v16 = vld [vmem:[%s0] sm:$0xf]
    %v17 = vld [vmem:[%s0 + $0x4] sm:$0xf]
    %v18 = vunpack.c.l.bf16 %v16
    %v19 = vunpack.c.l.bf16 %v17
    %v20 = vmul.f32 %v18, %v18
    %v21 = vmul.f32 %v19, %v19
    %vm22 = vcmask 261120
    %v23 = vsel %vm22, %v20, 0.0
    %24 = vadd.xlane.f32.xlu0 %v23
    %v25 = vpop.xlane.xlu0 %24
    %v26 = vsel %vm22, %v21, 0.0
    %27 = vadd.xlane.f32.xlu0 %v26
    %v28 = vpop.xlane.xlu0 %27
    %v29 = vrcp.pop 32.0
    %v30 = vmul.f32 %v25, %v29
    %v31 = vmul.f32 %v28, %v29
    %v32 = vadd.f32 %v30, 1e-06
    %v33 = vadd.f32 %v31, 1e-06
    %v34 = vrsqrt.pop %v32
    %v35 = vrsqrt.pop %v33
    %v36 = vmul.f32 %v18, %v34
    %v37 = vmul.f32 %v19, %v35
    %v38 = vld [vmem:[%s1] sm:$0x1]
    %v40 = vlaneseq
    %v41 = vshrl.u32 %v40, 7
    %v42 = vsub.s32 0, %v41
    %v43 = vrot.slane %v38, %v42
    %v45 = vmul.f32 %v36, %v43
    %v46 = vmul.f32 %v37, %v43
    %v47 = vpack.c.bf16 %v46, %v45
    %v48 = vld [vmem:[%s2] sm:$0xf]
    %v49 = vld [vmem:[%s2 + $0x4] sm:$0xf]
    %v50 = vld [vmem:[%s2 + $0x8] sm:$0xf]
    %v51 = vld [vmem:[%s2 + $0xc] sm:$0xf]
    %v56 = vunpack.c.l.b16 %v48
    %v57 = vunpack.c.l.b16 %v49
    %v58 = vunpack.c.l.b16 %v50
    %v59 = vunpack.c.l.b16 %v51
    %v60 = vpack.c.b16 %v57, %v56
    %v61 = vpack.c.b16 %v59, %v58
    %v65 = vsel %vm22, %v47, 0
    %67 = vmatprep.subr.bf16.mxu0 0
    %68 = vmatpush1.bf16.msra.mxu0 0
    %69 = vmatprep.subr.bf16.mxu0 0
    %70 = vmatpush1.bf16.msra.mxu0 0
    %71 = vmatprep.subr.bf16.mxu0 0
    %72 = vmatpush1.bf16.msra.mxu0 0
    %73 = vmatprep.subr.bf16.mxu0 0
    %74 = vmatpush1.bf16.msra.mxu0 0
    %75 = vmatprep.subr.bf16.mxu0 0
    %76 = vmatpush1.bf16.msra.mxu0 0
    %77 = vmatprep.subr.bf16.mxu0 0
    %78 = vmatpush1.bf16.msra.mxu0 0
    %79 = vmatprep.subr.bf16.mxu0 0
    %80 = vmatpush1.bf16.msra.mxu0 %v61
    %81 = vmatprep.subr.bf16.mxu0 0
    %82 = vmatpush1.bf16.msra.mxu0 %v60
    %83 = vmatprep.subr.bf16.mxu0 0
    %84 = vmatpush2.bf16.msra.mxu0 0
    %85 = vmatprep.subr.bf16.mxu0 0
    %86 = vmatpush2.bf16.msra.mxu0 0
    %87 = vmatprep.subr.bf16.mxu0 0
    %88 = vmatpush2.bf16.msra.mxu0 0
    %89 = vmatprep.subr.bf16.mxu0 0
    %90 = vmatpush2.bf16.msra.mxu0 0
    %91 = vmatprep.subr.bf16.mxu0 0
    %92 = vmatpush2.bf16.msra.mxu0 0
    %93 = vmatprep.subr.bf16.mxu0 0
    %94 = vmatpush2.bf16.msra.mxu0 0
    %95 = vmatprep.subr.bf16.mxu0 0
    %96 = vmatpush2.bf16.msra.mxu0 0
    %97 = vmatprep.subr.bf16.mxu0 0
    %98 = vmatpush2.bf16.msra.mxu0 0
    %99 = vmatprep.mubr.bf16.mxu0 0
    %100 = vmatmul.mubr.bf16.gmra.mxu0 %v65
    %v101 = vpop.f32.mrf.mxu0
    %v102 = vadd.f32 0.0, %v101
    %v103 = vpop.f32.mrf.mxu0
    %v104 = vpop.f32.mrf.mxu0
    %v105 = vadd.f32 0.0, %v104
    %v106 = vpop.f32.mrf.mxu0
    %107 = vdwg.mxu0
    %vm108 = vcmask 523264
    %109 = vst.msk [vmem:[#allocation2] sm:$0xff] %vm108, %v102
    %110 = vst.msk [vmem:[#allocation2 + $0x8] sm:$0xff] %vm108, %v105
    // Predicated region
    $region14: #{transformer_forward.17} parent=1 // pred_check
      _
    $region15: #{transformer_forward.17} parent=1 // pred_check_branch
      %112 = sbr.rel (0) target = $region17
    $region16: #{transformer_forward.17} parent=1 // pred_region
      %s114 = ssub.s32 256, 256
      %115 = vsyncadd [#allocation3], %s114
      %s116 = sshll.u32 [#allocation2], 4
      %s117 = int_to_ptr.vmem [resolvable:$true] %s116
      %122 = dma.vmem_to_hbm [thread:$0]  %s117, 256, %s3, [#allocation3], 128, 128, 8
    $region17: #{transformer_forward.17} parent=1 // pred_fallthru
      _
    // Predicated region
    $region18: #{transformer_forward.17} parent=1 // pred_check
      _
    $region19: #{transformer_forward.17} parent=1 // pred_check_branch
      %124 = sbr.rel (0) target = $region21
    $region20: #{transformer_forward.17} parent=1 // pred_region
      %125 = dma.done [#allocation3], 256
    $region21: #{transformer_forward.17} parent=1 // pred_fallthru
      _
    %126 = vsyncpa [#allocation3], 1

</llo_original>
